<compile_context>
chip_gen: v5e
topology: v5e:2x2
jax: 0.10.0
libtpu: 0.0.40
codegen_flags: <defaults>
</compile_context>

<pallas_src>
import functools

import jax
import jax.numpy as jnp
import numpy as np
from jax import lax
from jax.experimental import pallas as pl
from jax.experimental.pallas import tpu as pltpu

_LANE = 128


def _inter_pred_kernel(im1_ref, im2p_hbm, o_ref, ref_buf, acc_ref, l_ref, m_ref, sem,
                       *, search_size, block_size):
    """Grid = (B, num_row_bands); the full displacement search runs in-kernel.

    im1_ref : [1, band, W_pad]    current-frame band (auto-pipelined VMEM block)
    im2p_hbm: [B, Hp, Wp_pad]     zero-padded reference frame, left in HBM
    o_ref   : [1, band, W_pad]    predicted band
    ref_buf : [band+2*pad, Wp_pad] VMEM scratch, manually DMA'd row window
    acc_ref : [band, W_pad] f32   running  sum_d w_d * nbr_d
    l_ref   : [band, W_pad] f32   running  sum_d w_d        (rescaled, >= 1 at end)
    m_ref   : [band, W_pad] f32   running max of the (<= 0) logits
    """
    band, W = acc_ref.shape          # W here is the lane-padded width
    bs = block_size
    S = search_size
    pad = S // 2
    win = band + 2 * pad
    Wp = ref_buf.shape[1]

    b = pl.program_id(0)
    row0 = pl.program_id(1) * band   # global row offset of this band

    # Manual DMA of only the reference rows this band needs (review item #1):
    # the whole padded frame never becomes VMEM-resident.
    cp = pltpu.make_async_copy(im2p_hbm.at[b, pl.ds(row0, win), :], ref_buf, sem.at[0])
    cp.start()

    acc_ref[...] = jnp.zeros_like(acc_ref)
    l_ref[...] = jnp.zeros_like(l_ref)
    m_ref[...] = jnp.full_like(m_ref, -1e30)          # running max of logits (<= 0)

    im1 = im1_ref[0, :, :]                            # [band, W] f32

    # Single merged block-corner mask, built in-kernel from iota (no HBM constants).
    corner = (((lax.broadcasted_iota(jnp.int32, (band, W), 0) % bs) == 0) &
              ((lax.broadcasted_iota(jnp.int32, (band, W), 1) % bs) == 0))

    # Fold softmax temperature (-100) and avg-pool 1/bs^2 into one constant.
    neg_scale = jnp.float32(-100.0 / (bs * bs))

    pow2 = (bs & (bs - 1)) == 0

    def wsum(x, axis):
        """s[y] = sum_{c=0..bs-1} x[y+c]; exact at group starts (wrap lands on masked pos)."""
        n = x.shape[axis]
        s = x
        if pow2:                                      # log2(bs) doubling tree (XLU)
            step = 1
            while step < bs:
                s = s + pltpu.roll(s, (n - step) % n, axis=axis)
                step *= 2
        else:                                         # generic fallback
            for c in range(1, bs):
                s = s + pltpu.roll(x, (n - c) % n, axis=axis)
        return s

    def wbcast(x, axis):
        """Broadcast group-start values (x zero elsewhere) to the whole bs-group."""
        n = x.shape[axis]
        out = x
        if pow2:
            step = 1
            while step < bs:
                out = out + pltpu.roll(out, step, axis=axis)
                step *= 2
        else:
            for c in range(1, bs):
                out = out + pltpu.roll(x, c, axis=axis)
        return out

    cp.wait()

    def row_body(i, carry):
        rows = ref_buf[pl.ds(i, band), :]             # [band, Wp] reference rows, shift i
        for j in range(S):                            # horizontal shifts (static unroll)
            # TODO(synk): MXU-offloaded block pooling (kron matmuls) left unexplored;
            # XLU roll tree below is the current pooling path.
            shifted = rows if j == 0 else pltpu.roll(rows, Wp - j, axis=1)
            nbr = shifted[:, :W]                      # lane-tile-aligned slice
            diff = jnp.abs(im1 - nbr)
            s = wsum(diff, 1)                         # window sums, both axes
            s = wsum(s, 0)
            s = jnp.where(corner, s, 0.0)             # single merged select
            s = wbcast(s, 1)                          # broadcast back to pixel grid
            bsum = wbcast(s, 0)
            logit = neg_scale * bsum                  # <= 0

            # Online softmax (one EUP exp per displacement): robust to exp underflow.
            m_old = m_ref[...]
            m_new = jnp.maximum(m_old, logit)
            e = jnp.exp(jnp.minimum(m_old, logit) - m_new)
            alpha = jnp.where(m_old >= logit, 1.0, e)     # rescale of running sums
            w = jnp.where(logit >= m_old, 1.0, e)         # weight of this candidate
            l_ref[...] = alpha * l_ref[...] + w
            acc_ref[...] = alpha * acc_ref[...] + w * nbr
            m_ref[...] = m_new
        return carry

    lax.fori_loop(0, S, row_body, 0)

    # EUP approx reciprocal + one Newton step (full f32 precision, divide off VPU).
    l = l_ref[...]
    inv = pl.reciprocal(l, approx=True)
    inv = inv * (2.0 - l * inv)
    o_ref[0, :, :] = (acc_ref[...] * inv).astype(o_ref.dtype)


def _choose_band(H, block_size, batch, target=128):
    """Largest row band <= target dividing H, multiple of block_size and (8 or ==H).

    Ensures >= 2 grid programs when batch == 1 so v7x's second TensorCore is used.
    """
    def valid(c):
        return H % c == 0 and c % block_size == 0 and (c % 8 == 0 or c == H)

    cands = [c for c in range(min(target, H), block_size - 1, -1) if valid(c)]
    band = cands[0] if cands else H
    if batch * (H // band) < 2:
        smaller = [c for c in cands if H // c >= 2]
        if smaller:
            band = smaller[0]
    return band


def inter_prediction_pallas(im1, im2, search_size=21, block_size=4, band_target=128):
    """Equivalent of Prediction.inter_prediction_y(im1, im2, ..., soft=True)."""
    B, C, H, W = im1.shape
    assert C == 1, "Y / single-channel input expected"
    assert H % block_size == 0 and W % block_size == 0
    pad = search_size // 2

    # Lane-pad widths to multiples of 128: unmasked stores, single-rotate rolls.
    W_pad = -(-W // _LANE) * _LANE
    Wp = W + 2 * pad
    Wp_pad = -(-Wp // _LANE) * _LANE

    band = _choose_band(H, block_size, B, band_target)
    T = H // band
    win = band + 2 * pad

    # Host-side glue: drop channel dim, cast, zero-pad (reference: pad + lane pad).
    im1_p = jnp.pad(im1[:, 0].astype(jnp.float32),
                    ((0, 0), (0, 0), (0, W_pad - W)))                 # [B, H, W_pad]
    im2_p = jnp.pad(im2[:, 0].astype(jnp.float32),
                    ((0, 0), (pad, pad), (pad, Wp_pad - Wp + pad)))   # [B, Hp, Wp_pad]

    kernel = functools.partial(_inter_pred_kernel,
                               search_size=search_size, block_size=block_size)

    # Always-set, generation-aware VMEM limit: declared buffers + temporaries headroom
    # for the statically unrolled j loop, clamped below the physical ceiling.
    f32 = 4
    declared = (2 * 2 * band * W_pad          # im1 + out bands, double-buffered
                + win * Wp_pad                # reference row-window scratch
                + 3 * band * W_pad) * f32     # acc, l, m
    headroom = 6 * band * Wp_pad * f32
    phys = 64 * 1024 * 1024                   # smallest per-core VMEM (v7x) as fallback
    try:
        phys = int(pltpu.get_tpu_info().vmem_capacity_bytes)
    except Exception:
        pass
    vmem_limit = int(min(max(declared + headroom, 32 * 1024 * 1024), 0.9 * phys))

    out = pl.pallas_call(
        kernel,
        out_shape=jax.ShapeDtypeStruct((B, H, W_pad), jnp.float32),
        grid_spec=pltpu.PrefetchScalarGridSpec(
            num_scalar_prefetch=0,
            grid=(B, T),
            in_specs=[
                pl.BlockSpec((1, band, W_pad), lambda b, t: (b, t, 0)),  # im1 band
                pl.BlockSpec(memory_space=pl.ANY),                       # reference in HBM
            ],
            out_specs=pl.BlockSpec((1, band, W_pad), lambda b, t: (b, t, 0)),
            scratch_shapes=[
                pltpu.VMEM((win, Wp_pad), jnp.float32),   # reference row window
                pltpu.VMEM((band, W_pad), jnp.float32),   # acc: sum_d w_d * nbr_d
                pltpu.VMEM((band, W_pad), jnp.float32),   # l:   sum_d w_d
                pltpu.VMEM((band, W_pad), jnp.float32),   # m:   running logit max
                pltpu.SemaphoreType.DMA((1,)),
            ],
        ),
        compiler_params=pltpu.CompilerParams(
            dimension_semantics=("parallel", "parallel"),
            vmem_limit_bytes=vmem_limit,
        ),
    )(im1_p, im2_p)
    return out[:, None, :, :W]                                         # [B, 1, H, W]


class PredictionPallas:
    """Mirror of the PyTorch Prediction module (mode='inter', soft=True path)."""

    def __init__(self, search_size=21, block_size=4):
        self.search_size = search_size
        self.block_size = block_size

    def __call__(self, im1, im2, mode="inter", soft=True):
        assert mode == "inter" and soft, "only the default forward path is implemented"
        # TODO(synk): 'intra', hard (one-hot argmin), *_ste_* (flow) and RGB variants
        # are not implemented.
        return inter_prediction_pallas(im1, im2, self.search_size, self.block_size)


# ---------------- pure-JAX reference (mirrors the PyTorch code) ----------------
def inter_prediction_ref(im1, im2, search_size, block_size):
    B, C, H, W = im1.shape
    pad = search_size // 2
    im2p = jnp.pad(im2, ((0, 0), (0, 0), (pad, pad), (pad, pad)))
    costs, nbrs = [], []
    for i in range(search_size):
        for j in range(search_size):
            sh = im2p[:, :, i:i + H, j:j + W]
            nbrs.append(sh)
            d = jnp.abs(im1 - sh)
            c = d.reshape(B, 1, H // block_size, block_size,
                          W // block_size, block_size).mean(axis=(3, 5))
            costs.append(c)
    vol = jnp.concatenate(costs, axis=1)
    nbr = jnp.concatenate(nbrs, axis=1)
    idx = jax.nn.softmax(-100.0 * vol, axis=1)
    idx = jnp.repeat(jnp.repeat(idx, block_size, axis=2), block_size, axis=3)
    return jnp.sum(idx * nbr, axis=1, keepdims=True)


if __name__ == "__main__":
    B, C, H, W = 2, 1, 16, 16
    search_size, block_size = 7, 4   # small config consistent with the module API

    key = jax.random.PRNGKey(0)
    k1, k2 = jax.random.split(key)
    im1 = jax.random.uniform(k1, (B, C, H, W), dtype=jnp.float32)
    im2 = jax.random.uniform(k2, (B, C, H, W), dtype=jnp.float32)

    model = PredictionPallas(search_size=search_size, block_size=block_size)
    out = model(im1, im2, mode="inter", soft=True)
    out = jax.block_until_ready(out)

    ref = jax.block_until_ready(
        inter_prediction_ref(im1, im2, search_size, block_size))

    assert out.shape == (B, 1, H, W), out.shape
    np.testing.assert_allclose(np.asarray(out), np.asarray(ref), rtol=2e-4, atol=2e-5)
    print("KERNEL_OK")
</pallas_src>

<mosaic_0001>
module attributes {stable_mosaic.version = 11 : i64} {
  func.func @_inter_pred_kernel(%arg0: i32, %arg1: i32, %arg2: memref<1x16x128xf32, #tpu.memory_space<vmem>>, %arg3: memref<2x22x128xf32, #tpu.memory_space<any>>, %arg4: memref<1x16x128xf32, #tpu.memory_space<vmem>>, %arg5: memref<22x128xf32, #tpu.memory_space<vmem>>, %arg6: memref<16x128xf32, #tpu.memory_space<vmem>>, %arg7: memref<16x128xf32, #tpu.memory_space<vmem>>, %arg8: memref<16x128xf32, #tpu.memory_space<vmem>>, %arg9: memref<1x!tpu.dma_semaphore, #tpu.memory_space<semaphore_mem>>) attributes {dimension_semantics = [#tpu.dimension_semantics<parallel>, #tpu.dimension_semantics<parallel>], iteration_bounds = array<i64: 2, 1>, scalar_prefetch = 0 : i64, scratch_operands = 5 : i64, tpu.core_type = #tpu.core_type<tc>, window_params = [{transform_indices = @transform_0, window_bounds = array<i64: 1, 16, 128>}, {}, {transform_indices = @transform_2, window_bounds = array<i64: 1, 16, 128>}]} {
    %c16_i32 = arith.constant 16 : i32
    %0 = arith.muli %arg1, %c16_i32 : i32
    %c0_i32 = arith.constant 0 : i32
    %c0_i32_0 = arith.constant 0 : i32
    %1 = tpu.memref_slice %arg3[%arg0, %0, %c0_i32_0] : memref<2x22x128xf32, #tpu.memory_space<any>> -> memref<1x22x128xf32, #tpu.memory_space<any>>
    %2 = tpu.memref_squeeze %1 : memref<1x22x128xf32, #tpu.memory_space<any>> -> memref<22x128xf32, #tpu.memory_space<any>>
    %3 = tpu.memref_slice %arg9[%c0_i32] : memref<1x!tpu.dma_semaphore, #tpu.memory_space<semaphore_mem>> -> memref<1x!tpu.dma_semaphore, #tpu.memory_space<semaphore_mem>>
    %4 = tpu.memref_squeeze %3 : memref<1x!tpu.dma_semaphore, #tpu.memory_space<semaphore_mem>> -> memref<!tpu.dma_semaphore, #tpu.memory_space<semaphore_mem>>
    tpu.enqueue_dma source(%2 : memref<22x128xf32, #tpu.memory_space<any>>) target(%arg5 : memref<22x128xf32, #tpu.memory_space<vmem>>) target_semaphore(%4 : memref<!tpu.dma_semaphore, #tpu.memory_space<semaphore_mem>>)
    %cst = arith.constant 0.000000e+00 : f32
    %5 = vector.broadcast %cst : f32 to vector<16x128xf32>
    %c0 = arith.constant 0 : index
    %c0_1 = arith.constant 0 : index
    %6 = vector.load %arg6[%c0, %c0_1] : memref<16x128xf32, #tpu.memory_space<vmem>>, vector<16x128xf32>
    tpu.vector_store %arg6[%c0, %c0_1], %5 {strides = array<i32>} : memref<16x128xf32, #tpu.memory_space<vmem>>, vector<16x128xf32>,
    %cst_2 = arith.constant 0.000000e+00 : f32
    %7 = vector.broadcast %cst_2 : f32 to vector<16x128xf32>
    %c0_3 = arith.constant 0 : index
    %c0_4 = arith.constant 0 : index
    %8 = vector.load %arg7[%c0_3, %c0_4] : memref<16x128xf32, #tpu.memory_space<vmem>>, vector<16x128xf32>
    tpu.vector_store %arg7[%c0_3, %c0_4], %7 {strides = array<i32>} : memref<16x128xf32, #tpu.memory_space<vmem>>, vector<16x128xf32>,
    %cst_5 = arith.constant -1.000000e+30 : f32
    %9 = vector.broadcast %cst_5 : f32 to vector<16x128xf32>
    %c0_6 = arith.constant 0 : index
    %c0_7 = arith.constant 0 : index
    %10 = vector.load %arg8[%c0_6, %c0_7] : memref<16x128xf32, #tpu.memory_space<vmem>>, vector<16x128xf32>
    tpu.vector_store %arg8[%c0_6, %c0_7], %9 {strides = array<i32>} : memref<16x128xf32, #tpu.memory_space<vmem>>, vector<16x128xf32>,
    %c0_8 = arith.constant 0 : index
    %c0_9 = arith.constant 0 : index
    %c0_10 = arith.constant 0 : index
    %11 = vector.load %arg2[%c0_8, %c0_9, %c0_10] : memref<1x16x128xf32, #tpu.memory_space<vmem>>, vector<1x16x128xf32>
    %12 = vector.shape_cast %11 : vector<1x16x128xf32> to vector<16x128xf32>
    %13 = tpu.iota {dimensions = array<i32: 0>} : vector<16x128xi32>
    %c4_i32 = arith.constant 4 : i32
    %c0_i32_11 = arith.constant 0 : i32
    %14 = arith.cmpi eq, %c4_i32, %c0_i32_11 : i32
    %c1_i32 = arith.constant 1 : i32
    %15 = arith.select %14, %c1_i32, %c4_i32 : i32
    %16 = vector.broadcast %15 : i32 to vector<16x128xi32>
    %17 = arith.remsi %13, %16 : vector<16x128xi32>
    %c0_i32_12 = arith.constant 0 : i32
    %18 = vector.broadcast %c0_i32_12 : i32 to vector<16x128xi32>
    %19 = arith.cmpi ne, %17, %18 : vector<16x128xi32>
    %c0_i32_13 = arith.constant 0 : i32
    %20 = vector.broadcast %c0_i32_13 : i32 to vector<16x128xi32>
    %21 = arith.cmpi slt, %17, %20 : vector<16x128xi32>
    %c0_i32_14 = arith.constant 0 : i32
    %22 = arith.cmpi slt, %15, %c0_i32_14 : i32
    %23 = vector.broadcast %22 : i1 to vector<16x128xi1>
    %24 = vector.broadcast %23 : vector<16x128xi1> to vector<16x128xi1>
    %25 = arith.xori %21, %24 : vector<16x128xi1>
    %26 = arith.andi %25, %19 : vector<16x128xi1>
    %27 = vector.broadcast %15 : i32 to vector<16x128xi32>
    %28 = arith.addi %17, %27 : vector<16x128xi32>
    %29 = arith.select %26, %28, %17 : vector<16x128xi1>, vector<16x128xi32>
    %c0_i32_15 = arith.constant 0 : i32
    %30 = vector.broadcast %c0_i32_15 : i32 to vector<16x128xi32>
    %31 = arith.cmpi eq, %29, %30 : vector<16x128xi32>
    %32 = tpu.iota {dimensions = array<i32: 1>} : vector<16x128xi32>
    %c4_i32_16 = arith.constant 4 : i32
    %c0_i32_17 = arith.constant 0 : i32
    %33 = arith.cmpi eq, %c4_i32_16, %c0_i32_17 : i32
    %c1_i32_18 = arith.constant 1 : i32
    %34 = arith.select %33, %c1_i32_18, %c4_i32_16 : i32
    %35 = vector.broadcast %34 : i32 to vector<16x128xi32>
    %36 = arith.remsi %32, %35 : vector<16x128xi32>
    %c0_i32_19 = arith.constant 0 : i32
    %37 = vector.broadcast %c0_i32_19 : i32 to vector<16x128xi32>
    %38 = arith.cmpi ne, %36, %37 : vector<16x128xi32>
    %c0_i32_20 = arith.constant 0 : i32
    %39 = vector.broadcast %c0_i32_20 : i32 to vector<16x128xi32>
    %40 = arith.cmpi slt, %36, %39 : vector<16x128xi32>
    %c0_i32_21 = arith.constant 0 : i32
    %41 = arith.cmpi slt, %34, %c0_i32_21 : i32
    %42 = vector.broadcast %41 : i1 to vector<16x128xi1>
    %43 = vector.broadcast %42 : vector<16x128xi1> to vector<16x128xi1>
    %44 = arith.xori %40, %43 : vector<16x128xi1>
    %45 = arith.andi %44, %38 : vector<16x128xi1>
    %46 = vector.broadcast %34 : i32 to vector<16x128xi32>
    %47 = arith.addi %36, %46 : vector<16x128xi32>
    %48 = arith.select %45, %47, %36 : vector<16x128xi1>, vector<16x128xi32>
    %c0_i32_22 = arith.constant 0 : i32
    %49 = vector.broadcast %c0_i32_22 : i32 to vector<16x128xi32>
    %50 = arith.cmpi eq, %48, %49 : vector<16x128xi32>
    %51 = arith.andi %31, %50 : vector<16x128xi1>
    %c0_i32_23 = arith.constant 0 : i32
    %c0_i32_24 = arith.constant 0 : i32
    %52 = tpu.memref_slice %arg3[%arg0, %0, %c0_i32_24] : memref<2x22x128xf32, #tpu.memory_space<any>> -> memref<1x22x128xf32, #tpu.memory_space<any>>
    %53 = tpu.memref_squeeze %52 : memref<1x22x128xf32, #tpu.memory_space<any>> -> memref<22x128xf32, #tpu.memory_space<any>>
    %54 = tpu.memref_slice %arg9[%c0_i32_23] : memref<1x!tpu.dma_semaphore, #tpu.memory_space<semaphore_mem>> -> memref<1x!tpu.dma_semaphore, #tpu.memory_space<semaphore_mem>>
    %55 = tpu.memref_squeeze %54 : memref<1x!tpu.dma_semaphore, #tpu.memory_space<semaphore_mem>> -> memref<!tpu.dma_semaphore, #tpu.memory_space<semaphore_mem>>
    tpu.wait_dma2 semaphore(%55 : memref<!tpu.dma_semaphore, #tpu.memory_space<semaphore_mem>>) src(%53 : memref<22x128xf32, #tpu.memory_space<any>>) dst(%arg5 : memref<22x128xf32, #tpu.memory_space<vmem>>)
    %cst_25 = arith.constant -6.250000e+00 : f32
    %c0_i32_26 = arith.constant 0 : i32
    %c7_i32 = arith.constant 7 : i32
    %56 = arith.addi %c0_i32_26, %c7_i32 : i32
    %c1_i32_27 = arith.constant 1 : i32
    scf.for %arg10 = %c0_i32_26 to %56 step %c1_i32_27  : i32 {
      %68 = arith.index_cast %arg10 : i32 to index
      %c0_37 = arith.constant 0 : index
      %69 = vector.load %arg5[%68, %c0_37] : memref<22x128xf32, #tpu.memory_space<vmem>>, vector<16x128xf32>
      %70 = arith.subf %12, %69 : vector<16x128xf32>
      %71 = math.absf %70 : vector<16x128xf32>
      %c127_i32 = arith.constant 127 : i32
      %72 = tpu.dynamic_rotate %71 by %c127_i32 dim 1 : vector<16x128xf32>, i32 -> vector<16x128xf32>
      %73 = arith.addf %71, %72 : vector<16x128xf32>
      %c126_i32 = arith.constant 126 : i32
      %74 = tpu.dynamic_rotate %73 by %c126_i32 dim 1 : vector<16x128xf32>, i32 -> vector<16x128xf32>
      %75 = arith.addf %73, %74 : vector<16x128xf32>
      %c15_i32 = arith.constant 15 : i32
      %76 = tpu.dynamic_rotate %75 by %c15_i32 dim 0 : vector<16x128xf32>, i32 -> vector<16x128xf32>
      %77 = arith.addf %75, %76 : vector<16x128xf32>
      %c14_i32 = arith.constant 14 : i32
      %78 = tpu.dynamic_rotate %77 by %c14_i32 dim 0 : vector<16x128xf32>, i32 -> vector<16x128xf32>
      %79 = arith.addf %77, %78 : vector<16x128xf32>
      %cst_38 = arith.constant 0.000000e+00 : f32
      %80 = vector.broadcast %cst_38 : f32 to vector<16x128xf32>
      %81 = arith.select %51, %79, %80 : vector<16x128xi1>, vector<16x128xf32>
      %c1_i32_39 = arith.constant 1 : i32
      %82 = tpu.dynamic_rotate %81 by %c1_i32_39 dim 1 : vector<16x128xf32>, i32 -> vector<16x128xf32>
      %83 = arith.addf %81, %82 : vector<16x128xf32>
      %c2_i32 = arith.constant 2 : i32
      %84 = tpu.dynamic_rotate %83 by %c2_i32 dim 1 : vector<16x128xf32>, i32 -> vector<16x128xf32>
      %85 = arith.addf %83, %84 : vector<16x128xf32>
      %c1_i32_40 = arith.constant 1 : i32
      %86 = tpu.dynamic_rotate %85 by %c1_i32_40 dim 0 : vector<16x128xf32>, i32 -> vector<16x128xf32>
      %87 = arith.addf %85, %86 : vector<16x128xf32>
      %c2_i32_41 = arith.constant 2 : i32
      %88 = tpu.dynamic_rotate %87 by %c2_i32_41 dim 0 : vector<16x128xf32>, i32 -> vector<16x128xf32>
      %89 = arith.addf %87, %88 : vector<16x128xf32>
      %90 = vector.broadcast %cst_25 : f32 to vector<16x128xf32>
      %91 = arith.mulf %90, %89 : vector<16x128xf32>
      %c0_42 = arith.constant 0 : index
      %c0_43 = arith.constant 0 : index
      %92 = vector.load %arg8[%c0_42, %c0_43] : memref<16x128xf32, #tpu.memory_space<vmem>>, vector<16x128xf32>
      %93 = arith.maximumf %92, %91 : vector<16x128xf32>
      %94 = arith.minimumf %92, %91 : vector<16x128xf32>
      %95 = arith.subf %94, %93 : vector<16x128xf32>
      %96 = math.exp %95 : vector<16x128xf32>
      %97 = arith.cmpf oge, %92, %91 : vector<16x128xf32>
      %cst_44 = arith.constant 1.000000e+00 : f32
      %98 = vector.broadcast %cst_44 : f32 to vector<16x128xf32>
      %99 = arith.select %97, %98, %96 : vector<16x128xi1>, vector<16x128xf32>
      %100 = arith.cmpf oge, %91, %92 : vector<16x128xf32>
      %cst_45 = arith.constant 1.000000e+00 : f32
      %101 = vector.broadcast %cst_45 : f32 to vector<16x128xf32>
      %102 = arith.select %100, %101, %96 : vector<16x128xi1>, vector<16x128xf32>
      %c0_46 = arith.constant 0 : index
      %c0_47 = arith.constant 0 : index
      %103 = vector.load %arg7[%c0_46, %c0_47] : memref<16x128xf32, #tpu.memory_space<vmem>>, vector<16x128xf32>
      %104 = arith.mulf %99, %103 : vector<16x128xf32>
      %105 = arith.addf %104, %102 : vector<16x128xf32>
      %c0_48 = arith.constant 0 : index
      %c0_49 = arith.constant 0 : index
      %106 = vector.load %arg7[%c0_48, %c0_49] : memref<16x128xf32, #tpu.memory_space<vmem>>, vector<16x128xf32>
      tpu.vector_store %arg7[%c0_48, %c0_49], %105 {strides = array<i32>} : memref<16x128xf32, #tpu.memory_space<vmem>>, vector<16x128xf32>,
      %c0_50 = arith.constant 0 : index
      %c0_51 = arith.constant 0 : index
      %107 = vector.load %arg6[%c0_50, %c0_51] : memref<16x128xf32, #tpu.memory_space<vmem>>, vector<16x128xf32>
      %108 = arith.mulf %99, %107 : vector<16x128xf32>
      %109 = arith.mulf %102, %69 : vector<16x128xf32>
      %110 = arith.addf %108, %109 : vector<16x128xf32>
      %c0_52 = arith.constant 0 : index
      %c0_53 = arith.constant 0 : index
      %111 = vector.load %arg6[%c0_52, %c0_53] : memref<16x128xf32, #tpu.memory_space<vmem>>, vector<16x128xf32>
      tpu.vector_store %arg6[%c0_52, %c0_53], %110 {strides = array<i32>} : memref<16x128xf32, #tpu.memory_space<vmem>>, vector<16x128xf32>,
      %c0_54 = arith.constant 0 : index
      %c0_55 = arith.constant 0 : index
      %112 = vector.load %arg8[%c0_54, %c0_55] : memref<16x128xf32, #tpu.memory_space<vmem>>, vector<16x128xf32>
      tpu.vector_store %arg8[%c0_54, %c0_55], %93 {strides = array<i32>} : memref<16x128xf32, #tpu.memory_space<vmem>>, vector<16x128xf32>,
      %c127_i32_56 = arith.constant 127 : i32
      %113 = tpu.dynamic_rotate %69 by %c127_i32_56 dim 1 : vector<16x128xf32>, i32 -> vector<16x128xf32>
      %114 = arith.subf %12, %113 : vector<16x128xf32>
      %115 = math.absf %114 : vector<16x128xf32>
      %c127_i32_57 = arith.constant 127 : i32
      %116 = tpu.dynamic_rotate %115 by %c127_i32_57 dim 1 : vector<16x128xf32>, i32 -> vector<16x128xf32>
      %117 = arith.addf %115, %116 : vector<16x128xf32>
      %c126_i32_58 = arith.constant 126 : i32
      %118 = tpu.dynamic_rotate %117 by %c126_i32_58 dim 1 : vector<16x128xf32>, i32 -> vector<16x128xf32>
      %119 = arith.addf %117, %118 : vector<16x128xf32>
      %c15_i32_59 = arith.constant 15 : i32
      %120 = tpu.dynamic_rotate %119 by %c15_i32_59 dim 0 : vector<16x128xf32>, i32 -> vector<16x128xf32>
      %121 = arith.addf %119, %120 : vector<16x128xf32>
      %c14_i32_60 = arith.constant 14 : i32
      %122 = tpu.dynamic_rotate %121 by %c14_i32_60 dim 0 : vector<16x128xf32>, i32 -> vector<16x128xf32>
      %123 = arith.addf %121, %122 : vector<16x128xf32>
      %cst_61 = arith.constant 0.000000e+00 : f32
      %124 = vector.broadcast %cst_61 : f32 to vector<16x128xf32>
      %125 = arith.select %51, %123, %124 : vector<16x128xi1>, vector<16x128xf32>
      %c1_i32_62 = arith.constant 1 : i32
      %126 = tpu.dynamic_rotate %125 by %c1_i32_62 dim 1 : vector<16x128xf32>, i32 -> vector<16x128xf32>
      %127 = arith.addf %125, %126 : vector<16x128xf32>
      %c2_i32_63 = arith.constant 2 : i32
      %128 = tpu.dynamic_rotate %127 by %c2_i32_63 dim 1 : vector<16x128xf32>, i32 -> vector<16x128xf32>
      %129 = arith.addf %127, %128 : vector<16x128xf32>
      %c1_i32_64 = arith.constant 1 : i32
      %130 = tpu.dynamic_rotate %129 by %c1_i32_64 dim 0 : vector<16x128xf32>, i32 -> vector<16x128xf32>
      %131 = arith.addf %129, %130 : vector<16x128xf32>
      %c2_i32_65 = arith.constant 2 : i32
      %132 = tpu.dynamic_rotate %131 by %c2_i32_65 dim 0 : vector<16x128xf32>, i32 -> vector<16x128xf32>
      %133 = arith.addf %131, %132 : vector<16x128xf32>
      %134 = vector.broadcast %cst_25 : f32 to vector<16x128xf32>
      %135 = arith.mulf %134, %133 : vector<16x128xf32>
      %c0_66 = arith.constant 0 : index
      %c0_67 = arith.constant 0 : index
      %136 = vector.load %arg8[%c0_66, %c0_67] : memref<16x128xf32, #tpu.memory_space<vmem>>, vector<16x128xf32>
      %137 = arith.maximumf %136, %135 : vector<16x128xf32>
      %138 = arith.minimumf %136, %135 : vector<16x128xf32>
      %139 = arith.subf %138, %137 : vector<16x128xf32>
      %140 = math.exp %139 : vector<16x128xf32>
      %141 = arith.cmpf oge, %136, %135 : vector<16x128xf32>
      %cst_68 = arith.constant 1.000000e+00 : f32
      %142 = vector.broadcast %cst_68 : f32 to vector<16x128xf32>
      %143 = arith.select %141, %142, %140 : vector<16x128xi1>, vector<16x128xf32>
      %144 = arith.cmpf oge, %135, %136 : vector<16x128xf32>
      %cst_69 = arith.constant 1.000000e+00 : f32
      %145 = vector.broadcast %cst_69 : f32 to vector<16x128xf32>
      %146 = arith.select %144, %145, %140 : vector<16x128xi1>, vector<16x128xf32>
      %c0_70 = arith.constant 0 : index
      %c0_71 = arith.constant 0 : index
      %147 = vector.load %arg7[%c0_70, %c0_71] : memref<16x128xf32, #tpu.memory_space<vmem>>, vector<16x128xf32>
      %148 = arith.mulf %143, %147 : vector<16x128xf32>
      %149 = arith.addf %148, %146 : vector<16x128xf32>
      %c0_72 = arith.constant 0 : index
      %c0_73 = arith.constant 0 : index
      %150 = vector.load %arg7[%c0_72, %c0_73] : memref<16x128xf32, #tpu.memory_space<vmem>>, vector<16x128xf32>
      tpu.vector_store %arg7[%c0_72, %c0_73], %149 {strides = array<i32>} : memref<16x128xf32, #tpu.memory_space<vmem>>, vector<16x128xf32>,
      %c0_74 = arith.constant 0 : index
      %c0_75 = arith.constant 0 : index
      %151 = vector.load %arg6[%c0_74, %c0_75] : memref<16x128xf32, #tpu.memory_space<vmem>>, vector<16x128xf32>
      %152 = arith.mulf %143, %151 : vector<16x128xf32>
      %153 = arith.mulf %146, %113 : vector<16x128xf32>
      %154 = arith.addf %152, %153 : vector<16x128xf32>
      %c0_76 = arith.constant 0 : index
      %c0_77 = arith.constant 0 : index
      %155 = vector.load %arg6[%c0_76, %c0_77] : memref<16x128xf32, #tpu.memory_space<vmem>>, vector<16x128xf32>
      tpu.vector_store %arg6[%c0_76, %c0_77], %154 {strides = array<i32>} : memref<16x128xf32, #tpu.memory_space<vmem>>, vector<16x128xf32>,
      %c0_78 = arith.constant 0 : index
      %c0_79 = arith.constant 0 : index
      %156 = vector.load %arg8[%c0_78, %c0_79] : memref<16x128xf32, #tpu.memory_space<vmem>>, vector<16x128xf32>
      tpu.vector_store %arg8[%c0_78, %c0_79], %137 {strides = array<i32>} : memref<16x128xf32, #tpu.memory_space<vmem>>, vector<16x128xf32>,
      %c126_i32_80 = arith.constant 126 : i32
      %157 = tpu.dynamic_rotate %69 by %c126_i32_80 dim 1 : vector<16x128xf32>, i32 -> vector<16x128xf32>
      %158 = arith.subf %12, %157 : vector<16x128xf32>
      %159 = math.absf %158 : vector<16x128xf32>
      %c127_i32_81 = arith.constant 127 : i32
      %160 = tpu.dynamic_rotate %159 by %c127_i32_81 dim 1 : vector<16x128xf32>, i32 -> vector<16x128xf32>
      %161 = arith.addf %159, %160 : vector<16x128xf32>
      %c126_i32_82 = arith.constant 126 : i32
      %162 = tpu.dynamic_rotate %161 by %c126_i32_82 dim 1 : vector<16x128xf32>, i32 -> vector<16x128xf32>
      %163 = arith.addf %161, %162 : vector<16x128xf32>
      %c15_i32_83 = arith.constant 15 : i32
      %164 = tpu.dynamic_rotate %163 by %c15_i32_83 dim 0 : vector<16x128xf32>, i32 -> vector<16x128xf32>
      %165 = arith.addf %163, %164 : vector<16x128xf32>
      %c14_i32_84 = arith.constant 14 : i32
      %166 = tpu.dynamic_rotate %165 by %c14_i32_84 dim 0 : vector<16x128xf32>, i32 -> vector<16x128xf32>
      %167 = arith.addf %165, %166 : vector<16x128xf32>
      %cst_85 = arith.constant 0.000000e+00 : f32
      %168 = vector.broadcast %cst_85 : f32 to vector<16x128xf32>
      %169 = arith.select %51, %167, %168 : vector<16x128xi1>, vector<16x128xf32>
      %c1_i32_86 = arith.constant 1 : i32
      %170 = tpu.dynamic_rotate %169 by %c1_i32_86 dim 1 : vector<16x128xf32>, i32 -> vector<16x128xf32>
      %171 = arith.addf %169, %170 : vector<16x128xf32>
      %c2_i32_87 = arith.constant 2 : i32
      %172 = tpu.dynamic_rotate %171 by %c2_i32_87 dim 1 : vector<16x128xf32>, i32 -> vector<16x128xf32>
      %173 = arith.addf %171, %172 : vector<16x128xf32>
      %c1_i32_88 = arith.constant 1 : i32
      %174 = tpu.dynamic_rotate %173 by %c1_i32_88 dim 0 : vector<16x128xf32>, i32 -> vector<16x128xf32>
      %175 = arith.addf %173, %174 : vector<16x128xf32>
      %c2_i32_89 = arith.constant 2 : i32
      %176 = tpu.dynamic_rotate %175 by %c2_i32_89 dim 0 : vector<16x128xf32>, i32 -> vector<16x128xf32>
      %177 = arith.addf %175, %176 : vector<16x128xf32>
      %178 = vector.broadcast %cst_25 : f32 to vector<16x128xf32>
      %179 = arith.mulf %178, %177 : vector<16x128xf32>
      %c0_90 = arith.constant 0 : index
      %c0_91 = arith.constant 0 : index
      %180 = vector.load %arg8[%c0_90, %c0_91] : memref<16x128xf32, #tpu.memory_space<vmem>>, vector<16x128xf32>
      %181 = arith.maximumf %180, %179 : vector<16x128xf32>
      %182 = arith.minimumf %180, %179 : vector<16x128xf32>
      %183 = arith.subf %182, %181 : vector<16x128xf32>
      %184 = math.exp %183 : vector<16x128xf32>
      %185 = arith.cmpf oge, %180, %179 : vector<16x128xf32>
      %cst_92 = arith.constant 1.000000e+00 : f32
      %186 = vector.broadcast %cst_92 : f32 to vector<16x128xf32>
      %187 = arith.select %185, %186, %184 : vector<16x128xi1>, vector<16x128xf32>
      %188 = arith.cmpf oge, %179, %180 : vector<16x128xf32>
      %cst_93 = arith.constant 1.000000e+00 : f32
      %189 = vector.broadcast %cst_93 : f32 to vector<16x128xf32>
      %190 = arith.select %188, %189, %184 : vector<16x128xi1>, vector<16x128xf32>
      %c0_94 = arith.constant 0 : index
      %c0_95 = arith.constant 0 : index
      %191 = vector.load %arg7[%c0_94, %c0_95] : memref<16x128xf32, #tpu.memory_space<vmem>>, vector<16x128xf32>
      %192 = arith.mulf %187, %191 : vector<16x128xf32>
      %193 = arith.addf %192, %190 : vector<16x128xf32>
      %c0_96 = arith.constant 0 : index
      %c0_97 = arith.constant 0 : index
      %194 = vector.load %arg7[%c0_96, %c0_97] : memref<16x128xf32, #tpu.memory_space<vmem>>, vector<16x128xf32>
      tpu.vector_store %arg7[%c0_96, %c0_97], %193 {strides = array<i32>} : memref<16x128xf32, #tpu.memory_space<vmem>>, vector<16x128xf32>,
      %c0_98 = arith.constant 0 : index
      %c0_99 = arith.constant 0 : index
      %195 = vector.load %arg6[%c0_98, %c0_99] : memref<16x128xf32, #tpu.memory_space<vmem>>, vector<16x128xf32>
      %196 = arith.mulf %187, %195 : vector<16x128xf32>
      %197 = arith.mulf %190, %157 : vector<16x128xf32>
      %198 = arith.addf %196, %197 : vector<16x128xf32>
      %c0_100 = arith.constant 0 : index
      %c0_101 = arith.constant 0 : index
      %199 = vector.load %arg6[%c0_100, %c0_101] : memref<16x128xf32, #tpu.memory_space<vmem>>, vector<16x128xf32>
      tpu.vector_store %arg6[%c0_100, %c0_101], %198 {strides = array<i32>} : memref<16x128xf32, #tpu.memory_space<vmem>>, vector<16x128xf32>,
      %c0_102 = arith.constant 0 : index
      %c0_103 = arith.constant 0 : index
      %200 = vector.load %arg8[%c0_102, %c0_103] : memref<16x128xf32, #tpu.memory_space<vmem>>, vector<16x128xf32>
      tpu.vector_store %arg8[%c0_102, %c0_103], %181 {strides = array<i32>} : memref<16x128xf32, #tpu.memory_space<vmem>>, vector<16x128xf32>,
      %c125_i32 = arith.constant 125 : i32
      %201 = tpu.dynamic_rotate %69 by %c125_i32 dim 1 : vector<16x128xf32>, i32 -> vector<16x128xf32>
      %202 = arith.subf %12, %201 : vector<16x128xf32>
      %203 = math.absf %202 : vector<16x128xf32>
      %c127_i32_104 = arith.constant 127 : i32
      %204 = tpu.dynamic_rotate %203 by %c127_i32_104 dim 1 : vector<16x128xf32>, i32 -> vector<16x128xf32>
      %205 = arith.addf %203, %204 : vector<16x128xf32>
      %c126_i32_105 = arith.constant 126 : i32
      %206 = tpu.dynamic_rotate %205 by %c126_i32_105 dim 1 : vector<16x128xf32>, i32 -> vector<16x128xf32>
      %207 = arith.addf %205, %206 : vector<16x128xf32>
      %c15_i32_106 = arith.constant 15 : i32
      %208 = tpu.dynamic_rotate %207 by %c15_i32_106 dim 0 : vector<16x128xf32>, i32 -> vector<16x128xf32>
      %209 = arith.addf %207, %208 : vector<16x128xf32>
      %c14_i32_107 = arith.constant 14 : i32
      %210 = tpu.dynamic_rotate %209 by %c14_i32_107 dim 0 : vector<16x128xf32>, i32 -> vector<16x128xf32>
      %211 = arith.addf %209, %210 : vector<16x128xf32>
      %cst_108 = arith.constant 0.000000e+00 : f32
      %212 = vector.broadcast %cst_108 : f32 to vector<16x128xf32>
      %213 = arith.select %51, %211, %212 : vector<16x128xi1>, vector<16x128xf32>
      %c1_i32_109 = arith.constant 1 : i32
      %214 = tpu.dynamic_rotate %213 by %c1_i32_109 dim 1 : vector<16x128xf32>, i32 -> vector<16x128xf32>
      %215 = arith.addf %213, %214 : vector<16x128xf32>
      %c2_i32_110 = arith.constant 2 : i32
      %216 = tpu.dynamic_rotate %215 by %c2_i32_110 dim 1 : vector<16x128xf32>, i32 -> vector<16x128xf32>
      %217 = arith.addf %215, %216 : vector<16x128xf32>
      %c1_i32_111 = arith.constant 1 : i32
      %218 = tpu.dynamic_rotate %217 by %c1_i32_111 dim 0 : vector<16x128xf32>, i32 -> vector<16x128xf32>
      %219 = arith.addf %217, %218 : vector<16x128xf32>
      %c2_i32_112 = arith.constant 2 : i32
      %220 = tpu.dynamic_rotate %219 by %c2_i32_112 dim 0 : vector<16x128xf32>, i32 -> vector<16x128xf32>
      %221 = arith.addf %219, %220 : vector<16x128xf32>
      %222 = vector.broadcast %cst_25 : f32 to vector<16x128xf32>
      %223 = arith.mulf %222, %221 : vector<16x128xf32>
      %c0_113 = arith.constant 0 : index
      %c0_114 = arith.constant 0 : index
      %224 = vector.load %arg8[%c0_113, %c0_114] : memref<16x128xf32, #tpu.memory_space<vmem>>, vector<16x128xf32>
      %225 = arith.maximumf %224, %223 : vector<16x128xf32>
      %226 = arith.minimumf %224, %223 : vector<16x128xf32>
      %227 = arith.subf %226, %225 : vector<16x128xf32>
      %228 = math.exp %227 : vector<16x128xf32>
      %229 = arith.cmpf oge, %224, %223 : vector<16x128xf32>
      %cst_115 = arith.constant 1.000000e+00 : f32
      %230 = vector.broadcast %cst_115 : f32 to vector<16x128xf32>
      %231 = arith.select %229, %230, %228 : vector<16x128xi1>, vector<16x128xf32>
      %232 = arith.cmpf oge, %223, %224 : vector<16x128xf32>
      %cst_116 = arith.constant 1.000000e+00 : f32
      %233 = vector.broadcast %cst_116 : f32 to vector<16x128xf32>
      %234 = arith.select %232, %233, %228 : vector<16x128xi1>, vector<16x128xf32>
      %c0_117 = arith.constant 0 : index
      %c0_118 = arith.constant 0 : index
      %235 = vector.load %arg7[%c0_117, %c0_118] : memref<16x128xf32, #tpu.memory_space<vmem>>, vector<16x128xf32>
      %236 = arith.mulf %231, %235 : vector<16x128xf32>
      %237 = arith.addf %236, %234 : vector<16x128xf32>
      %c0_119 = arith.constant 0 : index
      %c0_120 = arith.constant 0 : index
      %238 = vector.load %arg7[%c0_119, %c0_120] : memref<16x128xf32, #tpu.memory_space<vmem>>, vector<16x128xf32>
      tpu.vector_store %arg7[%c0_119, %c0_120], %237 {strides = array<i32>} : memref<16x128xf32, #tpu.memory_space<vmem>>, vector<16x128xf32>,
      %c0_121 = arith.constant 0 : index
      %c0_122 = arith.constant 0 : index
      %239 = vector.load %arg6[%c0_121, %c0_122] : memref<16x128xf32, #tpu.memory_space<vmem>>, vector<16x128xf32>
      %240 = arith.mulf %231, %239 : vector<16x128xf32>
      %241 = arith.mulf %234, %201 : vector<16x128xf32>
      %242 = arith.addf %240, %241 : vector<16x128xf32>
      %c0_123 = arith.constant 0 : index
      %c0_124 = arith.constant 0 : index
      %243 = vector.load %arg6[%c0_123, %c0_124] : memref<16x128xf32, #tpu.memory_space<vmem>>, vector<16x128xf32>
      tpu.vector_store %arg6[%c0_123, %c0_124], %242 {strides = array<i32>} : memref<16x128xf32, #tpu.memory_space<vmem>>, vector<16x128xf32>,
      %c0_125 = arith.constant 0 : index
      %c0_126 = arith.constant 0 : index
      %244 = vector.load %arg8[%c0_125, %c0_126] : memref<16x128xf32, #tpu.memory_space<vmem>>, vector<16x128xf32>
      tpu.vector_store %arg8[%c0_125, %c0_126], %225 {strides = array<i32>} : memref<16x128xf32, #tpu.memory_space<vmem>>, vector<16x128xf32>,
      %c124_i32 = arith.constant 124 : i32
      %245 = tpu.dynamic_rotate %69 by %c124_i32 dim 1 : vector<16x128xf32>, i32 -> vector<16x128xf32>
      %246 = arith.subf %12, %245 : vector<16x128xf32>
      %247 = math.absf %246 : vector<16x128xf32>
      %c127_i32_127 = arith.constant 127 : i32
      %248 = tpu.dynamic_rotate %247 by %c127_i32_127 dim 1 : vector<16x128xf32>, i32 -> vector<16x128xf32>
      %249 = arith.addf %247, %248 : vector<16x128xf32>
      %c126_i32_128 = arith.constant 126 : i32
      %250 = tpu.dynamic_rotate %249 by %c126_i32_128 dim 1 : vector<16x128xf32>, i32 -> vector<16x128xf32>
      %251 = arith.addf %249, %250 : vector<16x128xf32>
      %c15_i32_129 = arith.constant 15 : i32
      %252 = tpu.dynamic_rotate %251 by %c15_i32_129 dim 0 : vector<16x128xf32>, i32 -> vector<16x128xf32>
      %253 = arith.addf %251, %252 : vector<16x128xf32>
      %c14_i32_130 = arith.constant 14 : i32
      %254 = tpu.dynamic_rotate %253 by %c14_i32_130 dim 0 : vector<16x128xf32>, i32 -> vector<16x128xf32>
      %255 = arith.addf %253, %254 : vector<16x128xf32>
      %cst_131 = arith.constant 0.000000e+00 : f32
      %256 = vector.broadcast %cst_131 : f32 to vector<16x128xf32>
      %257 = arith.select %51, %255, %256 : vector<16x128xi1>, vector<16x128xf32>
      %c1_i32_132 = arith.constant 1 : i32
      %258 = tpu.dynamic_rotate %257 by %c1_i32_132 dim 1 : vector<16x128xf32>, i32 -> vector<16x128xf32>
      %259 = arith.addf %257, %258 : vector<16x128xf32>
      %c2_i32_133 = arith.constant 2 : i32
      %260 = tpu.dynamic_rotate %259 by %c2_i32_133 dim 1 : vector<16x128xf32>, i32 -> vector<16x128xf32>
      %261 = arith.addf %259, %260 : vector<16x128xf32>
      %c1_i32_134 = arith.constant 1 : i32
      %262 = tpu.dynamic_rotate %261 by %c1_i32_134 dim 0 : vector<16x128xf32>, i32 -> vector<16x128xf32>
      %263 = arith.addf %261, %262 : vector<16x128xf32>
      %c2_i32_135 = arith.constant 2 : i32
      %264 = tpu.dynamic_rotate %263 by %c2_i32_135 dim 0 : vector<16x128xf32>, i32 -> vector<16x128xf32>
      %265 = arith.addf %263, %264 : vector<16x128xf32>
      %266 = vector.broadcast %cst_25 : f32 to vector<16x128xf32>
      %267 = arith.mulf %266, %265 : vector<16x128xf32>
      %c0_136 = arith.constant 0 : index
      %c0_137 = arith.constant 0 : index
      %268 = vector.load %arg8[%c0_136, %c0_137] : memref<16x128xf32, #tpu.memory_space<vmem>>, vector<16x128xf32>
      %269 = arith.maximumf %268, %267 : vector<16x128xf32>
      %270 = arith.minimumf %268, %267 : vector<16x128xf32>
      %271 = arith.subf %270, %269 : vector<16x128xf32>
      %272 = math.exp %271 : vector<16x128xf32>
      %273 = arith.cmpf oge, %268, %267 : vector<16x128xf32>
      %cst_138 = arith.constant 1.000000e+00 : f32
      %274 = vector.broadcast %cst_138 : f32 to vector<16x128xf32>
      %275 = arith.select %273, %274, %272 : vector<16x128xi1>, vector<16x128xf32>
      %276 = arith.cmpf oge, %267, %268 : vector<16x128xf32>
      %cst_139 = arith.constant 1.000000e+00 : f32
      %277 = vector.broadcast %cst_139 : f32 to vector<16x128xf32>
      %278 = arith.select %276, %277, %272 : vector<16x128xi1>, vector<16x128xf32>
      %c0_140 = arith.constant 0 : index
      %c0_141 = arith.constant 0 : index
      %279 = vector.load %arg7[%c0_140, %c0_141] : memref<16x128xf32, #tpu.memory_space<vmem>>, vector<16x128xf32>
      %280 = arith.mulf %275, %279 : vector<16x128xf32>
      %281 = arith.addf %280, %278 : vector<16x128xf32>
      %c0_142 = arith.constant 0 : index
      %c0_143 = arith.constant 0 : index
      %282 = vector.load %arg7[%c0_142, %c0_143] : memref<16x128xf32, #tpu.memory_space<vmem>>, vector<16x128xf32>
      tpu.vector_store %arg7[%c0_142, %c0_143], %281 {strides = array<i32>} : memref<16x128xf32, #tpu.memory_space<vmem>>, vector<16x128xf32>,
      %c0_144 = arith.constant 0 : index
      %c0_145 = arith.constant 0 : index
      %283 = vector.load %arg6[%c0_144, %c0_145] : memref<16x128xf32, #tpu.memory_space<vmem>>, vector<16x128xf32>
      %284 = arith.mulf %275, %283 : vector<16x128xf32>
      %285 = arith.mulf %278, %245 : vector<16x128xf32>
      %286 = arith.addf %284, %285 : vector<16x128xf32>
      %c0_146 = arith.constant 0 : index
      %c0_147 = arith.constant 0 : index
      %287 = vector.load %arg6[%c0_146, %c0_147] : memref<16x128xf32, #tpu.memory_space<vmem>>, vector<16x128xf32>
      tpu.vector_store %arg6[%c0_146, %c0_147], %286 {strides = array<i32>} : memref<16x128xf32, #tpu.memory_space<vmem>>, vector<16x128xf32>,
      %c0_148 = arith.constant 0 : index
      %c0_149 = arith.constant 0 : index
      %288 = vector.load %arg8[%c0_148, %c0_149] : memref<16x128xf32, #tpu.memory_space<vmem>>, vector<16x128xf32>
      tpu.vector_store %arg8[%c0_148, %c0_149], %269 {strides = array<i32>} : memref<16x128xf32, #tpu.memory_space<vmem>>, vector<16x128xf32>,
      %c123_i32 = arith.constant 123 : i32
      %289 = tpu.dynamic_rotate %69 by %c123_i32 dim 1 : vector<16x128xf32>, i32 -> vector<16x128xf32>
      %290 = arith.subf %12, %289 : vector<16x128xf32>
      %291 = math.absf %290 : vector<16x128xf32>
      %c127_i32_150 = arith.constant 127 : i32
      %292 = tpu.dynamic_rotate %291 by %c127_i32_150 dim 1 : vector<16x128xf32>, i32 -> vector<16x128xf32>
      %293 = arith.addf %291, %292 : vector<16x128xf32>
      %c126_i32_151 = arith.constant 126 : i32
      %294 = tpu.dynamic_rotate %293 by %c126_i32_151 dim 1 : vector<16x128xf32>, i32 -> vector<16x128xf32>
      %295 = arith.addf %293, %294 : vector<16x128xf32>
      %c15_i32_152 = arith.constant 15 : i32
      %296 = tpu.dynamic_rotate %295 by %c15_i32_152 dim 0 : vector<16x128xf32>, i32 -> vector<16x128xf32>
      %297 = arith.addf %295, %296 : vector<16x128xf32>
      %c14_i32_153 = arith.constant 14 : i32
      %298 = tpu.dynamic_rotate %297 by %c14_i32_153 dim 0 : vector<16x128xf32>, i32 -> vector<16x128xf32>
      %299 = arith.addf %297, %298 : vector<16x128xf32>
      %cst_154 = arith.constant 0.000000e+00 : f32
      %300 = vector.broadcast %cst_154 : f32 to vector<16x128xf32>
      %301 = arith.select %51, %299, %300 : vector<16x128xi1>, vector<16x128xf32>
      %c1_i32_155 = arith.constant 1 : i32
      %302 = tpu.dynamic_rotate %301 by %c1_i32_155 dim 1 : vector<16x128xf32>, i32 -> vector<16x128xf32>
      %303 = arith.addf %301, %302 : vector<16x128xf32>
      %c2_i32_156 = arith.constant 2 : i32
      %304 = tpu.dynamic_rotate %303 by %c2_i32_156 dim 1 : vector<16x128xf32>, i32 -> vector<16x128xf32>
      %305 = arith.addf %303, %304 : vector<16x128xf32>
      %c1_i32_157 = arith.constant 1 : i32
      %306 = tpu.dynamic_rotate %305 by %c1_i32_157 dim 0 : vector<16x128xf32>, i32 -> vector<16x128xf32>
      %307 = arith.addf %305, %306 : vector<16x128xf32>
      %c2_i32_158 = arith.constant 2 : i32
      %308 = tpu.dynamic_rotate %307 by %c2_i32_158 dim 0 : vector<16x128xf32>, i32 -> vector<16x128xf32>
      %309 = arith.addf %307, %308 : vector<16x128xf32>
      %310 = vector.broadcast %cst_25 : f32 to vector<16x128xf32>
      %311 = arith.mulf %310, %309 : vector<16x128xf32>
      %c0_159 = arith.constant 0 : index
      %c0_160 = arith.constant 0 : index
      %312 = vector.load %arg8[%c0_159, %c0_160] : memref<16x128xf32, #tpu.memory_space<vmem>>, vector<16x128xf32>
      %313 = arith.maximumf %312, %311 : vector<16x128xf32>
      %314 = arith.minimumf %312, %311 : vector<16x128xf32>
      %315 = arith.subf %314, %313 : vector<16x128xf32>
      %316 = math.exp %315 : vector<16x128xf32>
      %317 = arith.cmpf oge, %312, %311 : vector<16x128xf32>
      %cst_161 = arith.constant 1.000000e+00 : f32
      %318 = vector.broadcast %cst_161 : f32 to vector<16x128xf32>
      %319 = arith.select %317, %318, %316 : vector<16x128xi1>, vector<16x128xf32>
      %320 = arith.cmpf oge, %311, %312 : vector<16x128xf32>
      %cst_162 = arith.constant 1.000000e+00 : f32
      %321 = vector.broadcast %cst_162 : f32 to vector<16x128xf32>
      %322 = arith.select %320, %321, %316 : vector<16x128xi1>, vector<16x128xf32>
      %c0_163 = arith.constant 0 : index
      %c0_164 = arith.constant 0 : index
      %323 = vector.load %arg7[%c0_163, %c0_164] : memref<16x128xf32, #tpu.memory_space<vmem>>, vector<16x128xf32>
      %324 = arith.mulf %319, %323 : vector<16x128xf32>
      %325 = arith.addf %324, %322 : vector<16x128xf32>
      %c0_165 = arith.constant 0 : index
      %c0_166 = arith.constant 0 : index
      %326 = vector.load %arg7[%c0_165, %c0_166] : memref<16x128xf32, #tpu.memory_space<vmem>>, vector<16x128xf32>
      tpu.vector_store %arg7[%c0_165, %c0_166], %325 {strides = array<i32>} : memref<16x128xf32, #tpu.memory_space<vmem>>, vector<16x128xf32>,
      %c0_167 = arith.constant 0 : index
      %c0_168 = arith.constant 0 : index
      %327 = vector.load %arg6[%c0_167, %c0_168] : memref<16x128xf32, #tpu.memory_space<vmem>>, vector<16x128xf32>
      %328 = arith.mulf %319, %327 : vector<16x128xf32>
      %329 = arith.mulf %322, %289 : vector<16x128xf32>
      %330 = arith.addf %328, %329 : vector<16x128xf32>
      %c0_169 = arith.constant 0 : index
      %c0_170 = arith.constant 0 : index
      %331 = vector.load %arg6[%c0_169, %c0_170] : memref<16x128xf32, #tpu.memory_space<vmem>>, vector<16x128xf32>
      tpu.vector_store %arg6[%c0_169, %c0_170], %330 {strides = array<i32>} : memref<16x128xf32, #tpu.memory_space<vmem>>, vector<16x128xf32>,
      %c0_171 = arith.constant 0 : index
      %c0_172 = arith.constant 0 : index
      %332 = vector.load %arg8[%c0_171, %c0_172] : memref<16x128xf32, #tpu.memory_space<vmem>>, vector<16x128xf32>
      tpu.vector_store %arg8[%c0_171, %c0_172], %313 {strides = array<i32>} : memref<16x128xf32, #tpu.memory_space<vmem>>, vector<16x128xf32>,
      %c122_i32 = arith.constant 122 : i32
      %333 = tpu.dynamic_rotate %69 by %c122_i32 dim 1 : vector<16x128xf32>, i32 -> vector<16x128xf32>
      %334 = arith.subf %12, %333 : vector<16x128xf32>
      %335 = math.absf %334 : vector<16x128xf32>
      %c127_i32_173 = arith.constant 127 : i32
      %336 = tpu.dynamic_rotate %335 by %c127_i32_173 dim 1 : vector<16x128xf32>, i32 -> vector<16x128xf32>
      %337 = arith.addf %335, %336 : vector<16x128xf32>
      %c126_i32_174 = arith.constant 126 : i32
      %338 = tpu.dynamic_rotate %337 by %c126_i32_174 dim 1 : vector<16x128xf32>, i32 -> vector<16x128xf32>
      %339 = arith.addf %337, %338 : vector<16x128xf32>
      %c15_i32_175 = arith.constant 15 : i32
      %340 = tpu.dynamic_rotate %339 by %c15_i32_175 dim 0 : vector<16x128xf32>, i32 -> vector<16x128xf32>
      %341 = arith.addf %339, %340 : vector<16x128xf32>
      %c14_i32_176 = arith.constant 14 : i32
      %342 = tpu.dynamic_rotate %341 by %c14_i32_176 dim 0 : vector<16x128xf32>, i32 -> vector<16x128xf32>
      %343 = arith.addf %341, %342 : vector<16x128xf32>
      %cst_177 = arith.constant 0.000000e+00 : f32
      %344 = vector.broadcast %cst_177 : f32 to vector<16x128xf32>
      %345 = arith.select %51, %343, %344 : vector<16x128xi1>, vector<16x128xf32>
      %c1_i32_178 = arith.constant 1 : i32
      %346 = tpu.dynamic_rotate %345 by %c1_i32_178 dim 1 : vector<16x128xf32>, i32 -> vector<16x128xf32>
      %347 = arith.addf %345, %346 : vector<16x128xf32>
      %c2_i32_179 = arith.constant 2 : i32
      %348 = tpu.dynamic_rotate %347 by %c2_i32_179 dim 1 : vector<16x128xf32>, i32 -> vector<16x128xf32>
      %349 = arith.addf %347, %348 : vector<16x128xf32>
      %c1_i32_180 = arith.constant 1 : i32
      %350 = tpu.dynamic_rotate %349 by %c1_i32_180 dim 0 : vector<16x128xf32>, i32 -> vector<16x128xf32>
      %351 = arith.addf %349, %350 : vector<16x128xf32>
      %c2_i32_181 = arith.constant 2 : i32
      %352 = tpu.dynamic_rotate %351 by %c2_i32_181 dim 0 : vector<16x128xf32>, i32 -> vector<16x128xf32>
      %353 = arith.addf %351, %352 : vector<16x128xf32>
      %354 = vector.broadcast %cst_25 : f32 to vector<16x128xf32>
      %355 = arith.mulf %354, %353 : vector<16x128xf32>
      %c0_182 = arith.constant 0 : index
      %c0_183 = arith.constant 0 : index
      %356 = vector.load %arg8[%c0_182, %c0_183] : memref<16x128xf32, #tpu.memory_space<vmem>>, vector<16x128xf32>
      %357 = arith.maximumf %356, %355 : vector<16x128xf32>
      %358 = arith.minimumf %356, %355 : vector<16x128xf32>
      %359 = arith.subf %358, %357 : vector<16x128xf32>
      %360 = math.exp %359 : vector<16x128xf32>
      %361 = arith.cmpf oge, %356, %355 : vector<16x128xf32>
      %cst_184 = arith.constant 1.000000e+00 : f32
      %362 = vector.broadcast %cst_184 : f32 to vector<16x128xf32>
      %363 = arith.select %361, %362, %360 : vector<16x128xi1>, vector<16x128xf32>
      %364 = arith.cmpf oge, %355, %356 : vector<16x128xf32>
      %cst_185 = arith.constant 1.000000e+00 : f32
      %365 = vector.broadcast %cst_185 : f32 to vector<16x128xf32>
      %366 = arith.select %364, %365, %360 : vector<16x128xi1>, vector<16x128xf32>
      %c0_186 = arith.constant 0 : index
      %c0_187 = arith.constant 0 : index
      %367 = vector.load %arg7[%c0_186, %c0_187] : memref<16x128xf32, #tpu.memory_space<vmem>>, vector<16x128xf32>
      %368 = arith.mulf %363, %367 : vector<16x128xf32>
      %369 = arith.addf %368, %366 : vector<16x128xf32>
      %c0_188 = arith.constant 0 : index
      %c0_189 = arith.constant 0 : index
      %370 = vector.load %arg7[%c0_188, %c0_189] : memref<16x128xf32, #tpu.memory_space<vmem>>, vector<16x128xf32>
      tpu.vector_store %arg7[%c0_188, %c0_189], %369 {strides = array<i32>} : memref<16x128xf32, #tpu.memory_space<vmem>>, vector<16x128xf32>,
      %c0_190 = arith.constant 0 : index
      %c0_191 = arith.constant 0 : index
      %371 = vector.load %arg6[%c0_190, %c0_191] : memref<16x128xf32, #tpu.memory_space<vmem>>, vector<16x128xf32>
      %372 = arith.mulf %363, %371 : vector<16x128xf32>
      %373 = arith.mulf %366, %333 : vector<16x128xf32>
      %374 = arith.addf %372, %373 : vector<16x128xf32>
      %c0_192 = arith.constant 0 : index
      %c0_193 = arith.constant 0 : index
      %375 = vector.load %arg6[%c0_192, %c0_193] : memref<16x128xf32, #tpu.memory_space<vmem>>, vector<16x128xf32>
      tpu.vector_store %arg6[%c0_192, %c0_193], %374 {strides = array<i32>} : memref<16x128xf32, #tpu.memory_space<vmem>>, vector<16x128xf32>,
      %c0_194 = arith.constant 0 : index
      %c0_195 = arith.constant 0 : index
      %376 = vector.load %arg8[%c0_194, %c0_195] : memref<16x128xf32, #tpu.memory_space<vmem>>, vector<16x128xf32>
      tpu.vector_store %arg8[%c0_194, %c0_195], %357 {strides = array<i32>} : memref<16x128xf32, #tpu.memory_space<vmem>>, vector<16x128xf32>,
    }
    %c7_i32_28 = arith.constant 7 : i32
    %c0_29 = arith.constant 0 : index
    %c0_30 = arith.constant 0 : index
    %57 = vector.load %arg7[%c0_29, %c0_30] : memref<16x128xf32, #tpu.memory_space<vmem>>, vector<16x128xf32>
    %58 = tpu.reciprocal %57 {approx = true} : vector<16x128xf32> -> vector<16x128xf32>
    %59 = arith.mulf %57, %58 : vector<16x128xf32>
    %cst_31 = arith.constant 2.000000e+00 : f32
    %60 = vector.broadcast %cst_31 : f32 to vector<16x128xf32>
    %61 = arith.subf %60, %59 : vector<16x128xf32>
    %62 = arith.mulf %58, %61 : vector<16x128xf32>
    %c0_32 = arith.constant 0 : index
    %c0_33 = arith.constant 0 : index
    %63 = vector.load %arg6[%c0_32, %c0_33] : memref<16x128xf32, #tpu.memory_space<vmem>>, vector<16x128xf32>
    %64 = arith.mulf %63, %62 : vector<16x128xf32>
    %c0_34 = arith.constant 0 : index
    %c0_35 = arith.constant 0 : index
    %c0_36 = arith.constant 0 : index
    %65 = vector.load %arg4[%c0_34, %c0_35, %c0_36] : memref<1x16x128xf32, #tpu.memory_space<vmem>>, vector<1x16x128xf32>
    %66 = vector.shape_cast %65 : vector<1x16x128xf32> to vector<16x128xf32>
    %67 = vector.shape_cast %64 : vector<16x128xf32> to vector<1x16x128xf32>
    tpu.vector_store %arg4[%c0_34, %c0_35, %c0_36], %67 {strides = array<i32>} : memref<1x16x128xf32, #tpu.memory_space<vmem>>, vector<1x16x128xf32>,
    return
  }
  func.func @transform_0(%arg0: i32, %arg1: i32) -> (i32, i32, i32) {
    %c0_i32 = arith.constant 0 : i32
    %c0_i32_0 = arith.constant 0 : i32
    return %arg0, %arg1, %c0_i32 : i32, i32, i32
  }
  func.func @transform_2(%arg0: i32, %arg1: i32) -> (i32, i32, i32) {
    %c0_i32 = arith.constant 0 : i32
    %c0_i32_0 = arith.constant 0 : i32
    return %arg0, %arg1, %c0_i32 : i32, i32, i32
  }
}

</mosaic_0001>

<llo_original>
// kernel: tpu_custom_call.1
$region0: #{tpu_custom_call.1}
  #allocation0 [shape = 'u32[]', space=smem, size = 0x4, offset = 0x4, fixed_abs, tag = 'smem constant byte address 0x4 - core index']
  #allocation1 [shape = 'u32[72,128]{1,0:T(1,128)}', space=vmem, size = 0x9000, scoped, tag = 'internal scratch']
  #allocation2 [shape = 'f32[22,128]{1,0:T(8,128)}', space=vmem, size = 0x3000, scoped, tag = 'scratch operand']
  #allocation3 [shape = 'f32[16,128]{1,0:T(8,128)}', space=vmem, size = 0x2000, scoped, tag = 'scratch operand']
  #allocation4 [shape = 'f32[16,128]{1,0:T(8,128)}', space=vmem, size = 0x2000, scoped, tag = 'scratch operand']
  #allocation5 [shape = 'f32[16,128]{1,0:T(8,128)}', space=vmem, size = 0x2000, scoped, tag = 'scratch operand']
  #allocation6 [shape = 's32[1]{0}', space=sflag, size = 0x4, scoped, tag = 'scratch operand']
  #allocation9 [shape = 's32[]', space=sflag, size = 0x4, offset = 0, fixed_abs, tag = 'sflag constant byte address 0x0 - dummy sync flag']
  %s0 = inlined_call_operand.vmem [shape: f32[2,16,128], index: 0, kind: input, shape index: {}]
  %s1 = inlined_call_operand.vmem [shape: f32[2,22,128], index: 1, kind: input, shape index: {}]
  %s2 = inlined_call_operand.hbm [shape: f32[2,16,128], index: 2, kind: output, shape index: {}]
  %s3 = sld [smem:[#allocation0]]
  $region66: #{tpu_custom_call.1} parent=0
    _
  %s5 = ssub.s32 1, %s3
  %s6 = scalar_select 0, %s5, %s3
  $region1: #{tpu_custom_call.1} parent=0
    #allocation7 [shape = 'u8[16384]{0}', space=vmem, size = 0x4000, scoped, tag = 'output window, operand 0']
    #allocation8 [shape = 's32[2]{0}', space=sflag, size = 0x8, scoped, tag = 'scoped memory for tpu_custom_call.1']
    %7 = vsyncpa [#allocation8], 0
    %s8 = scalar_lea.sflag [#allocation8], 1
    %9 = vsyncpa %s8, 0
    loop: start=0, step=1, limit=4
    $region2: #{tpu_custom_call.1} parent=1 // loop_pre_header
      _
    $region3: #{tpu_custom_call.1} parent=1 // loop_header
      %s11 = sphi 0, %s15
      %p12 = scmp.ge.s32.totalorder %s11, 4
      %s18 = sphi 0, %s30
      %s19 = sphi 0, %s26
      %s20 = sphi 0, %s18
      %s21 = sphi 0, %s19
      %s22 = sphi 0, %s20
      %s23 = sphi 0, %s21
      %s35 = sphi 0, %s37
      %s38 = sphi 0, %s35
      %s39 = sphi 0, %s38
      %s55 = sphi 0, %s39
      %s63 = sphi 0, %s65
      %s66 = sphi 0, %s63
      %s67 = sphi 0, %s66
      %s83 = sphi 0, %s67
    $region4: #{tpu_custom_call.1} parent=1 // loop_header_branch
      %14 = sbr.rel (%p12) target = $region8
    $region5: #{tpu_custom_call.1} parent=1 // loop_body
      %s16 = ssub.s32 %s11, 1
      %s17 = ssub.s32 %s11, 2
      %s24 = sadd.s32 1, %s19
      %p25 = scmp.ge.s32.totalorder %s24, 1
      %s26 = scalar_select %p25, 0, %s24
      %s27 = sadd.s32 1, %s18
      %s28 = scalar_select %p25, %s27, %s18
      %p29 = scmp.ge.s32.totalorder %s28, 2
      %s30 = scalar_select %p29, 0, %s28
      %s31 = ssub.s32 %s18, %s30
      %s32 = ssub.s32 %s19, %s26
      %s33 = sor.u32 %s31, %s32
      %p34 = scmp.eq.s32.totalorder %s33, 0
      %s36 = sadd.s32 %s35, 1
      %s37 = scalar_select %p34, %s35, %s36
      %p40 = pneg %p34
      %p41 = scmp.eq.s32.totalorder %s11, 1
      %p42 = por %p40, %p41
      %p43 = scmp.ne.s32.totalorder %s35, %s38
      %p44 = scmp.eq.s32.totalorder %s11, 0
      %p45 = por %p43, %p44
      %p46 = scmp.ne.s32.totalorder %s35, %s38
      %p47 = scmp.eq.s32.totalorder %s16, 1
      %p48 = por %p46, %p47
      %p49 = scmp.ne.s32.totalorder %s38, %s39
      %p50 = scmp.eq.s32.totalorder %s16, 0
      %p51 = por %p49, %p50
      %p52 = scmp.ne.s32.totalorder %s38, %s39
      %p53 = scmp.eq.s32.totalorder %s17, 1
      %p54 = por %p52, %p53
      %p56 = scmp.ne.s32.totalorder %s39, %s55
      %p57 = scmp.eq.s32.totalorder %s17, 0
      %p58 = por %p56, %p57
      %s59 = ssub.s32 %s18, %s30
      %s60 = ssub.s32 %s19, %s26
      %s61 = sor.u32 %s59, %s60
      %p62 = scmp.eq.s32.totalorder %s61, 0
      %s64 = sadd.s32 %s63, 1
      %s65 = scalar_select %p62, %s63, %s64
      %p68 = pneg %p62
      %p69 = scmp.eq.s32.totalorder %s11, 1
      %p70 = por %p68, %p69
      %p71 = scmp.ne.s32.totalorder %s63, %s66
      %p72 = scmp.eq.s32.totalorder %s11, 0
      %p73 = por %p71, %p72
      %p74 = scmp.ne.s32.totalorder %s63, %s66
      %p75 = scmp.eq.s32.totalorder %s16, 1
      %p76 = por %p74, %p75
      %p77 = scmp.ne.s32.totalorder %s66, %s67
      %p78 = scmp.eq.s32.totalorder %s16, 0
      %p79 = por %p77, %p78
      %p80 = scmp.ne.s32.totalorder %s66, %s67
      %p81 = scmp.eq.s32.totalorder %s17, 1
      %p82 = por %p80, %p81
      %p84 = scmp.ne.s32.totalorder %s67, %s83
      %p85 = scmp.eq.s32.totalorder %s17, 0
      %p86 = por %p84, %p85
      %p87 = scmp.le.s32.totalorder 1, %s11
      %p88 = scmp.lt.s32.totalorder %s11, 3
      %p89 = pnand %p87, %p88
      %p90 = pneg %p89
      // Predicated region
      $region9: #{tpu_custom_call.1} parent=5 // pred_check
        _
      $region10: #{tpu_custom_call.1} parent=5 // pred_check_branch
        %92 = sbr.rel (%p89) target = $region12
      $region11: #{tpu_custom_call.1} parent=5 // pred_region
        %s93 = ssub.s32 %s11, 1
      $region12: #{tpu_custom_call.1} parent=5 // pred_fallthru
        _
      %p94 = scmp.lt.s32.totalorder %s11, 2
      // Predicated region
      $region13: #{tpu_custom_call.1} parent=5 // pred_check
        %p95 = pneg %p94
      $region14: #{tpu_custom_call.1} parent=5 // pred_check_branch
        %97 = sbr.rel (%p95) target = $region16
      $region15: #{tpu_custom_call.1} parent=5 // pred_region
        // Predicated region
        $region17: #{tpu_custom_call.1} parent=15 // pred_check
          %p98 = pneg %p45
        $region18: #{tpu_custom_call.1} parent=15 // pred_check_branch
          %100 = sbr.rel (%p98) target = $region20
        $region19: #{tpu_custom_call.1} parent=15 // pred_region
          %s101 = smul.u32 2, %s19
          %p102 = scmp.lt.s32.totalorder %s18, 1
          %s103 = scalar_select %p102, %s18, 1
          %p104 = scmp.lt.s32.totalorder %s101, 1
          %s105 = scalar_select %p104, %s101, 1
          %s106 = smul.addr %s103, 2
          %s107 = sadd.s32 %s105, %s106
          %s108 = smul.addr %s107, 8
          %s109 = scalar_lea.vmem %s0, %s108
          %s110 = smul.u32 2, %s19
        $region20: #{tpu_custom_call.1} parent=15 // pred_fallthru
          _
      $region16: #{tpu_custom_call.1} parent=5 // pred_fallthru
        _
      %p111 = scmp.le.s32.totalorder 1, %s11
      %p112 = scmp.lt.s32.totalorder %s11, 3
      %p113 = pnand %p111, %p112
      %p114 = pneg %p113
      // Predicated region
      $region21: #{tpu_custom_call.1} parent=5 // pred_check
        _
      $region22: #{tpu_custom_call.1} parent=5 // pred_check_branch
        %116 = sbr.rel (%p113) target = $region24
      $region23: #{tpu_custom_call.1} parent=5 // pred_region
        %s117 = ssub.s32 %s11, 1
        %s118 = smul.u32 2, %s21
        %p119 = scmp.lt.s32.totalorder %s20, 1
        %s120 = scalar_select %p119, %s20, 1
        %p121 = scmp.lt.s32.totalorder %s118, 1
        %s122 = scalar_select %p121, %s118, 1
        %s123 = smul.addr %s120, 2
        %s124 = sadd.s32 %s122, %s123
        %s125 = smul.addr %s124, 8
        %s126 = scalar_lea.vmem %s0, %s125
        %p127 = pneg %p51
        %p128 = pneg %p48
        %p129 = pneg %p79
        %p130 = pneg %p76
        %s131 = sand.u32 %s66, 1
        %s132 = scalar_lea.sflag [#allocation8], %s131
        %s133 = sand.u32 %s66, 1
        %s134 = smul.addr %s133, 16
        %s135 = scalar_lea.vmem [#allocation7], %s134
        %s136 = smul.u32 2, %s21
        %p137 = scmp.lt.s32.totalorder %s20, 1
        %s138 = scalar_select %p137, %s20, 1
        %p139 = scmp.lt.s32.totalorder %s136, 1
        %s140 = scalar_select %p139, %s136, 1
        %s141 = smul.addr %s138, 2
        %s142 = sadd.s32 %s140, %s141
        %s143 = smul.addr %s142, 8
        %s144 = scalar_lea.vmem %s0, %s143
        %s145 = smul.u32 2, %s21
        %s146 = smul.u32 2, %s21
        %s147 = smul.u32 %s21, 16
        %s148 = smul.u32 %s20, 24
        %s149 = sadd.s32 %s147, %s148
        %s150 = scalar_lea.vmem %s1, %s149
        // Predicated region
        $region25: #{tpu_custom_call.1} parent=23 // pred_check
          _
        $region26: #{tpu_custom_call.1} parent=23 // pred_check_branch
          %152 = sbr.rel (0) target = $region28
        $region27: #{tpu_custom_call.1} parent=23 // pred_region
          %s153 = scalar_lea.vmem %s150, 16
          %s154 = scalar_lea.vmem [#allocation2], 16
          loop: start=0, step=1, limit=1
          $region29: #{tpu_custom_call.1} parent=27 // loop_pre_header
            _
          $region30: #{tpu_custom_call.1} parent=27 // loop_header
            %s156 = sphi 0, %s160
            %p157 = scmp.ge.s32.totalorder %s156, 1
            %s161 = sphi %s150, %s150
            %s162 = sphi [#allocation2], [#allocation2]
          $region31: #{tpu_custom_call.1} parent=27 // loop_header_branch
            %159 = sbr.rel (%p157) target = $region35
          $region32: #{tpu_custom_call.1} parent=27 // loop_body
            %v163 = vld [vmem:[%s161] sm:$0xff]
            %164 = vst [vmem:[%s162] sm:$0xff] %v163
            %v165 = vld [vmem:[%s161 + $0x8] sm:$0xff]
            %166 = vst [vmem:[%s162 + $0x8] sm:$0xff] %v165
          $region33: #{tpu_custom_call.1} parent=27 // loop_footer
            %s160 = sadd.s32 1, %s156
          $region34: #{tpu_custom_call.1} parent=27 // loop_footer_branch
            %155 = sbr.rel target = $region30
          $region35: #{tpu_custom_call.1} parent=27 // loop_exit
            _
          %s168 = ssub.s32 64, 1
          loop: start=0, step=1, limit=1
          $region36: #{tpu_custom_call.1} parent=27 // loop_pre_header
            _
          $region37: #{tpu_custom_call.1} parent=27 // loop_header
            %s170 = sphi 0, %s174
            %p171 = scmp.ge.s32.totalorder %s170, 1
            %s175 = sphi %s153, %s153
            %s176 = sphi %s154, %s154
          $region38: #{tpu_custom_call.1} parent=27 // loop_header_branch
            %173 = sbr.rel (%p171) target = $region42
          $region39: #{tpu_custom_call.1} parent=27 // loop_body
            %v177 = vld [vmem:[%s175] sm:%s168]
            %178 = vst [vmem:[%s176] sm:%s168] %v177
          $region40: #{tpu_custom_call.1} parent=27 // loop_footer
            %s174 = sadd.s32 1, %s170
          $region41: #{tpu_custom_call.1} parent=27 // loop_footer_branch
            %169 = sbr.rel target = $region37
          $region42: #{tpu_custom_call.1} parent=27 // loop_exit
            _
        $region28: #{tpu_custom_call.1} parent=23 // pred_fallthru
          _
        // Predicated region
        $region43: #{tpu_custom_call.1} parent=23 // pred_check
          _
        $region44: #{tpu_custom_call.1} parent=23 // pred_check_branch
          %181 = sbr.rel (0) target = $region46
        $region45: #{tpu_custom_call.1} parent=23 // pred_region
          %182 = vsyncadd [#allocation6], 352
        $region46: #{tpu_custom_call.1} parent=23 // pred_fallthru
          _
        %183 = vst [vmem:[#allocation3] sm:$0xff] 0.0
        %184 = vst [vmem:[#allocation3 + $0x8] sm:$0xff] 0.0
        %185 = vst [vmem:[#allocation4] sm:$0xff] 0.0
        %186 = vst [vmem:[#allocation4 + $0x8] sm:$0xff] 0.0
        %187 = vst [vmem:[#allocation5] sm:$0xff] -1e+30
        %188 = vst [vmem:[#allocation5 + $0x8] sm:$0xff] -1e+30
        %v189 = vld [vmem:[%s144] sm:$0xff]
        %v190 = vld [vmem:[%s144 + $0x8] sm:$0xff]
        %v191 = vlaneseq
        %v192 = vshrl.u32 %v191, 7
        %v193 = vadd.s32 %v192, 8
        %vm194 = vcmp.lt.s32.totalorder %v192, 0
        %v195 = vsub.s32 0, %v192
        %v196 = vsel %vm194, %v195, %v192
        %v197 = vshrl.u32 %v196, 2
        %v198 = vand.u32 %v196, 3
        %v199 = vsub.s32 0, %v198
        %v200 = vsel %vm194, %v199, %v198
        %vm201 = vcmp.lt.s32.totalorder %v193, 0
        %v202 = vsub.s32 0, %v193
        %v203 = vsel %vm201, %v202, %v193
        %v204 = vshrl.u32 %v203, 2
        %v205 = vand.u32 %v203, 3
        %v206 = vsub.s32 0, %v205
        %v207 = vsel %vm201, %v206, %v205
        %vm208 = vcmp.ne.s32.totalorder %v200, 0
        %vm209 = vcmp.ne.s32.totalorder %v207, 0
        %vm210 = vcmp.lt.s32.totalorder %v200, 0
        %vm211 = vcmp.lt.s32.totalorder %v207, 0
        %vm212 = vmand %vm210, %vm208
        %vm213 = vmand %vm211, %vm209
        %v214 = vadd.s32 %v200, 4
        %v215 = vadd.s32 %v207, 4
        %v216 = vsel %vm212, %v214, %v200
        %v217 = vsel %vm213, %v215, %v207
        %vm218 = vcmp.eq.s32.totalorder %v216, 0
        %vm219 = vcmp.eq.s32.totalorder %v217, 0
        %v220 = vlaneseq
        %v221 = vand.u32 %v220, 127
        %vm222 = vcmp.lt.s32.totalorder %v221, 0
        %v223 = vsub.s32 0, %v221
        %v224 = vsel %vm222, %v223, %v221
        %v225 = vshrl.u32 %v224, 2
        %v226 = vand.u32 %v224, 3
        %v227 = vsub.s32 0, %v226
        %v228 = vsel %vm222, %v227, %v226
        %vm229 = vcmp.ne.s32.totalorder %v228, 0
        %vm230 = vcmp.lt.s32.totalorder %v228, 0
        %vm231 = vmand %vm230, %vm229
        %v232 = vadd.s32 %v228, 4
        %v233 = vsel %vm231, %v232, %v228
        %vm234 = vcmp.eq.s32.totalorder %v233, 0
        %vm235 = vmand %vm218, %vm234
        %vm236 = vmand %vm219, %vm234
        %s237 = smul.u32 22, 1
        %s238 = sshll.u32 %s237, 4
        %239 = dma.done [#allocation6], %s238
        loop: start=0, step=1, limit=7
        $region47: #{tpu_custom_call.1} parent=23 // loop_pre_header
          _
        $region48: #{tpu_custom_call.1} parent=23 // loop_header
          %s241 = sphi 0, %s245
          %p242 = scmp.ge.s32.totalorder %s241, 7
        $region49: #{tpu_custom_call.1} parent=23 // loop_header_branch
          %244 = sbr.rel (%p242) target = $region53
        $region50: #{tpu_custom_call.1} parent=23 // loop_body
          %s246 = scalar_lea.vmem [#allocation2], %s241
          %v247 = vld [vmem:[%s246] sm:$0xff]
          %v248 = vld [vmem:[%s246 + $0x8] sm:$0xff]
          %v249 = vsub.f32 %v189, %v247
          %v250 = vsub.f32 %v190, %v248
          %v251 = vand.u32 2147483647, %v249
          %v252 = vand.u32 2147483647, %v250
          %253 = vrot.lane.b32.xlu0 %v251, 127
          %v254 = vpop.permute.xlu0 %253
          %255 = vrot.lane.b32.xlu0 %v252, 127
          %v256 = vpop.permute.xlu0 %255
          %v257 = vadd.f32 %v251, %v254
          %v258 = vadd.f32 %v252, %v256
          %259 = vrot.lane.b32.xlu0 %v257, 126
          %v260 = vpop.permute.xlu0 %259
          %261 = vrot.lane.b32.xlu0 %v258, 126
          %v262 = vpop.permute.xlu0 %261
          %v263 = vadd.f32 %v257, %v260
          %v264 = vadd.f32 %v258, %v262
          %v265 = vrot.slane %v263, 1
          %v266 = vrot.slane %v264, 1
          %vm267 = vcmp.lt.s32.totalorder %v192, 7
          %v268 = vsel %vm267, %v265, %v266
          %v269 = vsel %vm267, %v266, %v265
          %v270 = vadd.f32 %v263, %v268
          %v271 = vadd.f32 %v264, %v269
          %v272 = vrot.slane %v270, 2
          %v273 = vrot.slane %v271, 2
          %vm274 = vcmp.lt.s32.totalorder %v192, 6
          %v275 = vsel %vm274, %v272, %v273
          %v276 = vsel %vm274, %v273, %v272
          %v277 = vadd.f32 %v270, %v275
          %v278 = vadd.f32 %v271, %v276
          %v279 = vsel %vm235, %v277, 0.0
          %v280 = vsel %vm236, %v278, 0.0
          %281 = vrot.lane.b32.xlu0 %v279, 1
          %v282 = vpop.permute.xlu0 %281
          %283 = vrot.lane.b32.xlu0 %v280, 1
          %v284 = vpop.permute.xlu0 %283
          %v285 = vadd.f32 %v279, %v282
          %v286 = vadd.f32 %v280, %v284
          %287 = vrot.lane.b32.xlu0 %v285, 2
          %v288 = vpop.permute.xlu0 %287
          %289 = vrot.lane.b32.xlu0 %v286, 2
          %v290 = vpop.permute.xlu0 %289
          %v291 = vadd.f32 %v285, %v288
          %v292 = vadd.f32 %v286, %v290
          %v293 = vrot.slane %v291, 7
          %v294 = vrot.slane %v292, 7
          %vm295 = vcmp.lt.s32.totalorder %v192, 1
          %v296 = vsel %vm295, %v293, %v294
          %v297 = vsel %vm295, %v294, %v293
          %v298 = vadd.f32 %v291, %v297
          %v299 = vadd.f32 %v292, %v296
          %v300 = vrot.slane %v298, 6
          %v301 = vrot.slane %v299, 6
          %vm302 = vcmp.lt.s32.totalorder %v192, 2
          %v303 = vsel %vm302, %v300, %v301
          %v304 = vsel %vm302, %v301, %v300
          %v305 = vadd.f32 %v298, %v304
          %v306 = vadd.f32 %v299, %v303
          %v307 = vmul.f32 %v305, -6.25
          %v308 = vmul.f32 %v306, -6.25
          %v309 = vld [vmem:[#allocation5] sm:$0xff]
          %v310 = vld [vmem:[#allocation5 + $0x8] sm:$0xff]
          %v311 = vmax.f32 %v309, %v307
          %v312 = vmax.f32 %v310, %v308
          %v313 = vmin.f32 %v309, %v307
          %v314 = vmin.f32 %v310, %v308
          %v315 = vsub.f32 %v313, %v311
          %v316 = vsub.f32 %v314, %v312
          %v317 = vmul.f32 %v315, 1.442695
          %v318 = vpow.pop %v317
          %v319 = vmul.f32 %v316, 1.442695
          %v320 = vpow.pop %v319
          %vm321 = vcmp.ge.f32.partialorder %v309, %v307
          %vm322 = vcmp.ge.f32.partialorder %v310, %v308
          %v323 = vsel %vm321, 1.0, %v318
          %v324 = vsel %vm322, 1.0, %v320
          %vm325 = vcmp.ge.f32.partialorder %v307, %v309
          %vm326 = vcmp.ge.f32.partialorder %v308, %v310
          %v327 = vsel %vm325, 1.0, %v318
          %v328 = vsel %vm326, 1.0, %v320
          %v329 = vld [vmem:[#allocation4] sm:$0xff]
          %v330 = vld [vmem:[#allocation4 + $0x8] sm:$0xff]
          %v331 = vmul.f32 %v323, %v329
          %v332 = vmul.f32 %v324, %v330
          %v333 = vadd.f32 %v331, %v327
          %v334 = vadd.f32 %v332, %v328
          %335 = vst [vmem:[#allocation4] sm:$0xff] %v333
          %336 = vst [vmem:[#allocation4 + $0x8] sm:$0xff] %v334
          %v337 = vld [vmem:[#allocation3] sm:$0xff]
          %v338 = vld [vmem:[#allocation3 + $0x8] sm:$0xff]
          %v339 = vmul.f32 %v323, %v337
          %v340 = vmul.f32 %v324, %v338
          %v341 = vmul.f32 %v327, %v247
          %v342 = vmul.f32 %v328, %v248
          %v343 = vadd.f32 %v339, %v341
          %v344 = vadd.f32 %v340, %v342
          %345 = vst [vmem:[#allocation3] sm:$0xff] %v343
          %346 = vst [vmem:[#allocation3 + $0x8] sm:$0xff] %v344
          %347 = vst [vmem:[#allocation5] sm:$0xff] %v311
          %348 = vst [vmem:[#allocation5 + $0x8] sm:$0xff] %v312
          %349 = vrot.lane.b32.xlu0 %v247, 127
          %v350 = vpop.permute.xlu0 %349
          %351 = vrot.lane.b32.xlu0 %v248, 127
          %v352 = vpop.permute.xlu0 %351
          %v353 = vsub.f32 %v189, %v350
          %v354 = vsub.f32 %v190, %v352
          %v355 = vand.u32 2147483647, %v353
          %v356 = vand.u32 2147483647, %v354
          %357 = vrot.lane.b32.xlu0 %v355, 127
          %v358 = vpop.permute.xlu0 %357
          %359 = vrot.lane.b32.xlu0 %v356, 127
          %v360 = vpop.permute.xlu0 %359
          %v361 = vadd.f32 %v355, %v358
          %v362 = vadd.f32 %v356, %v360
          %363 = vrot.lane.b32.xlu0 %v361, 126
          %v364 = vpop.permute.xlu0 %363
          %365 = vrot.lane.b32.xlu0 %v362, 126
          %v366 = vpop.permute.xlu0 %365
          %v367 = vadd.f32 %v361, %v364
          %v368 = vadd.f32 %v362, %v366
          %v369 = vrot.slane %v367, 1
          %v370 = vrot.slane %v368, 1
          %v371 = vsel %vm267, %v369, %v370
          %v372 = vsel %vm267, %v370, %v369
          %v373 = vadd.f32 %v367, %v371
          %v374 = vadd.f32 %v368, %v372
          %v375 = vrot.slane %v373, 2
          %v376 = vrot.slane %v374, 2
          %v377 = vsel %vm274, %v375, %v376
          %v378 = vsel %vm274, %v376, %v375
          %v379 = vadd.f32 %v373, %v377
          %v380 = vadd.f32 %v374, %v378
          %v381 = vsel %vm235, %v379, 0.0
          %v382 = vsel %vm236, %v380, 0.0
          %383 = vrot.lane.b32.xlu0 %v381, 1
          %v384 = vpop.permute.xlu0 %383
          %385 = vrot.lane.b32.xlu0 %v382, 1
          %v386 = vpop.permute.xlu0 %385
          %v387 = vadd.f32 %v381, %v384
          %v388 = vadd.f32 %v382, %v386
          %389 = vrot.lane.b32.xlu0 %v387, 2
          %v390 = vpop.permute.xlu0 %389
          %391 = vrot.lane.b32.xlu0 %v388, 2
          %v392 = vpop.permute.xlu0 %391
          %v393 = vadd.f32 %v387, %v390
          %v394 = vadd.f32 %v388, %v392
          %v395 = vrot.slane %v393, 7
          %v396 = vrot.slane %v394, 7
          %v397 = vsel %vm295, %v395, %v396
          %v398 = vsel %vm295, %v396, %v395
          %v399 = vadd.f32 %v393, %v398
          %v400 = vadd.f32 %v394, %v397
          %v401 = vrot.slane %v399, 6
          %v402 = vrot.slane %v400, 6
          %v403 = vsel %vm302, %v401, %v402
          %v404 = vsel %vm302, %v402, %v401
          %v405 = vadd.f32 %v399, %v404
          %v406 = vadd.f32 %v400, %v403
          %v407 = vmul.f32 %v405, -6.25
          %v408 = vmul.f32 %v406, -6.25
          %v409 = vld [vmem:[#allocation5] sm:$0xff]
          %v410 = vld [vmem:[#allocation5 + $0x8] sm:$0xff]
          %v411 = vmax.f32 %v409, %v407
          %v412 = vmax.f32 %v410, %v408
          %v413 = vmin.f32 %v409, %v407
          %v414 = vmin.f32 %v410, %v408
          %v415 = vsub.f32 %v413, %v411
          %v416 = vsub.f32 %v414, %v412
          %v417 = vmul.f32 %v415, 1.442695
          %v418 = vpow.pop %v417
          %v419 = vmul.f32 %v416, 1.442695
          %v420 = vpow.pop %v419
          %vm421 = vcmp.ge.f32.partialorder %v409, %v407
          %vm422 = vcmp.ge.f32.partialorder %v410, %v408
          %v423 = vsel %vm421, 1.0, %v418
          %v424 = vsel %vm422, 1.0, %v420
          %vm425 = vcmp.ge.f32.partialorder %v407, %v409
          %vm426 = vcmp.ge.f32.partialorder %v408, %v410
          %v427 = vsel %vm425, 1.0, %v418
          %v428 = vsel %vm426, 1.0, %v420
          %v429 = vld [vmem:[#allocation4] sm:$0xff]
          %v430 = vld [vmem:[#allocation4 + $0x8] sm:$0xff]
          %v431 = vmul.f32 %v423, %v429
          %v432 = vmul.f32 %v424, %v430
          %v433 = vadd.f32 %v431, %v427
          %v434 = vadd.f32 %v432, %v428
          %435 = vst [vmem:[#allocation4] sm:$0xff] %v433
          %436 = vst [vmem:[#allocation4 + $0x8] sm:$0xff] %v434
          %v437 = vld [vmem:[#allocation3] sm:$0xff]
          %v438 = vld [vmem:[#allocation3 + $0x8] sm:$0xff]
          %v439 = vmul.f32 %v423, %v437
          %v440 = vmul.f32 %v424, %v438
          %v441 = vmul.f32 %v427, %v350
          %v442 = vmul.f32 %v428, %v352
          %v443 = vadd.f32 %v439, %v441
          %v444 = vadd.f32 %v440, %v442
          %445 = vst [vmem:[#allocation3] sm:$0xff] %v443
          %446 = vst [vmem:[#allocation3 + $0x8] sm:$0xff] %v444
          %447 = vst [vmem:[#allocation5] sm:$0xff] %v411
          %448 = vst [vmem:[#allocation5 + $0x8] sm:$0xff] %v412
          %449 = vrot.lane.b32.xlu0 %v247, 126
          %v450 = vpop.permute.xlu0 %449
          %451 = vrot.lane.b32.xlu0 %v248, 126
          %v452 = vpop.permute.xlu0 %451
          %v453 = vsub.f32 %v189, %v450
          %v454 = vsub.f32 %v190, %v452
          %v455 = vand.u32 2147483647, %v453
          %v456 = vand.u32 2147483647, %v454
          %457 = vrot.lane.b32.xlu0 %v455, 127
          %v458 = vpop.permute.xlu0 %457
          %459 = vrot.lane.b32.xlu0 %v456, 127
          %v460 = vpop.permute.xlu0 %459
          %v461 = vadd.f32 %v455, %v458
          %v462 = vadd.f32 %v456, %v460
          %463 = vrot.lane.b32.xlu0 %v461, 126
          %v464 = vpop.permute.xlu0 %463
          %465 = vrot.lane.b32.xlu0 %v462, 126
          %v466 = vpop.permute.xlu0 %465
          %v467 = vadd.f32 %v461, %v464
          %v468 = vadd.f32 %v462, %v466
          %v469 = vrot.slane %v467, 1
          %v470 = vrot.slane %v468, 1
          %v471 = vsel %vm267, %v469, %v470
          %v472 = vsel %vm267, %v470, %v469
          %v473 = vadd.f32 %v467, %v471
          %v474 = vadd.f32 %v468, %v472
          %v475 = vrot.slane %v473, 2
          %v476 = vrot.slane %v474, 2
          %v477 = vsel %vm274, %v475, %v476
          %v478 = vsel %vm274, %v476, %v475
          %v479 = vadd.f32 %v473, %v477
          %v480 = vadd.f32 %v474, %v478
          %v481 = vsel %vm235, %v479, 0.0
          %v482 = vsel %vm236, %v480, 0.0
          %483 = vrot.lane.b32.xlu0 %v481, 1
          %v484 = vpop.permute.xlu0 %483
          %485 = vrot.lane.b32.xlu0 %v482, 1
          %v486 = vpop.permute.xlu0 %485
          %v487 = vadd.f32 %v481, %v484
          %v488 = vadd.f32 %v482, %v486
          %489 = vrot.lane.b32.xlu0 %v487, 2
          %v490 = vpop.permute.xlu0 %489
          %491 = vrot.lane.b32.xlu0 %v488, 2
          %v492 = vpop.permute.xlu0 %491
          %v493 = vadd.f32 %v487, %v490
          %v494 = vadd.f32 %v488, %v492
          %v495 = vrot.slane %v493, 7
          %v496 = vrot.slane %v494, 7
          %v497 = vsel %vm295, %v495, %v496
          %v498 = vsel %vm295, %v496, %v495
          %v499 = vadd.f32 %v493, %v498
          %v500 = vadd.f32 %v494, %v497
          %v501 = vrot.slane %v499, 6
          %v502 = vrot.slane %v500, 6
          %v503 = vsel %vm302, %v501, %v502
          %v504 = vsel %vm302, %v502, %v501
          %v505 = vadd.f32 %v499, %v504
          %v506 = vadd.f32 %v500, %v503
          %v507 = vmul.f32 %v505, -6.25
          %v508 = vmul.f32 %v506, -6.25
          %v509 = vld [vmem:[#allocation5] sm:$0xff]
          %v510 = vld [vmem:[#allocation5 + $0x8] sm:$0xff]
          %v511 = vmax.f32 %v509, %v507
          %v512 = vmax.f32 %v510, %v508
          %v513 = vmin.f32 %v509, %v507
          %v514 = vmin.f32 %v510, %v508
          %v515 = vsub.f32 %v513, %v511
          %v516 = vsub.f32 %v514, %v512
          %v517 = vmul.f32 %v515, 1.442695
          %v518 = vpow.pop %v517
          %v519 = vmul.f32 %v516, 1.442695
          %v520 = vpow.pop %v519
          %vm521 = vcmp.ge.f32.partialorder %v509, %v507
          %vm522 = vcmp.ge.f32.partialorder %v510, %v508
          %v523 = vsel %vm521, 1.0, %v518
          %v524 = vsel %vm522, 1.0, %v520
          %vm525 = vcmp.ge.f32.partialorder %v507, %v509
          %vm526 = vcmp.ge.f32.partialorder %v508, %v510
          %v527 = vsel %vm525, 1.0, %v518
          %v528 = vsel %vm526, 1.0, %v520
          %v529 = vld [vmem:[#allocation4] sm:$0xff]
          %v530 = vld [vmem:[#allocation4 + $0x8] sm:$0xff]
          %v531 = vmul.f32 %v523, %v529
          %v532 = vmul.f32 %v524, %v530
          %v533 = vadd.f32 %v531, %v527
          %v534 = vadd.f32 %v532, %v528
          %535 = vst [vmem:[#allocation4] sm:$0xff] %v533
          %536 = vst [vmem:[#allocation4 + $0x8] sm:$0xff] %v534
          %v537 = vld [vmem:[#allocation3] sm:$0xff]
          %v538 = vld [vmem:[#allocation3 + $0x8] sm:$0xff]
          %v539 = vmul.f32 %v523, %v537
          %v540 = vmul.f32 %v524, %v538
          %v541 = vmul.f32 %v527, %v450
          %v542 = vmul.f32 %v528, %v452
          %v543 = vadd.f32 %v539, %v541
          %v544 = vadd.f32 %v540, %v542
          %545 = vst [vmem:[#allocation3] sm:$0xff] %v543
          %546 = vst [vmem:[#allocation3 + $0x8] sm:$0xff] %v544
          %547 = vst [vmem:[#allocation5] sm:$0xff] %v511
          %548 = vst [vmem:[#allocation5 + $0x8] sm:$0xff] %v512
          %549 = vrot.lane.b32.xlu0 %v247, 125
          %v550 = vpop.permute.xlu0 %549
          %551 = vrot.lane.b32.xlu0 %v248, 125
          %v552 = vpop.permute.xlu0 %551
          %v553 = vsub.f32 %v189, %v550
          %v554 = vsub.f32 %v190, %v552
          %v555 = vand.u32 2147483647, %v553
          %v556 = vand.u32 2147483647, %v554
          %557 = vrot.lane.b32.xlu0 %v555, 127
          %v558 = vpop.permute.xlu0 %557
          %559 = vrot.lane.b32.xlu0 %v556, 127
          %v560 = vpop.permute.xlu0 %559
          %v561 = vadd.f32 %v555, %v558
          %v562 = vadd.f32 %v556, %v560
          %563 = vrot.lane.b32.xlu0 %v561, 126
          %v564 = vpop.permute.xlu0 %563
          %565 = vrot.lane.b32.xlu0 %v562, 126
          %v566 = vpop.permute.xlu0 %565
          %v567 = vadd.f32 %v561, %v564
          %v568 = vadd.f32 %v562, %v566
          %v569 = vrot.slane %v567, 1
          %v570 = vrot.slane %v568, 1
          %v571 = vsel %vm267, %v569, %v570
          %v572 = vsel %vm267, %v570, %v569
          %v573 = vadd.f32 %v567, %v571
          %v574 = vadd.f32 %v568, %v572
          %v575 = vrot.slane %v573, 2
          %v576 = vrot.slane %v574, 2
          %v577 = vsel %vm274, %v575, %v576
          %v578 = vsel %vm274, %v576, %v575
          %v579 = vadd.f32 %v573, %v577
          %v580 = vadd.f32 %v574, %v578
          %v581 = vsel %vm235, %v579, 0.0
          %v582 = vsel %vm236, %v580, 0.0
          %583 = vrot.lane.b32.xlu0 %v581, 1
          %v584 = vpop.permute.xlu0 %583
          %585 = vrot.lane.b32.xlu0 %v582, 1
          %v586 = vpop.permute.xlu0 %585
          %v587 = vadd.f32 %v581, %v584
          %v588 = vadd.f32 %v582, %v586
          %589 = vrot.lane.b32.xlu0 %v587, 2
          %v590 = vpop.permute.xlu0 %589
          %591 = vrot.lane.b32.xlu0 %v588, 2
          %v592 = vpop.permute.xlu0 %591
          %v593 = vadd.f32 %v587, %v590
          %v594 = vadd.f32 %v588, %v592
          %v595 = vrot.slane %v593, 7
          %v596 = vrot.slane %v594, 7
          %v597 = vsel %vm295, %v595, %v596
          %v598 = vsel %vm295, %v596, %v595
          %v599 = vadd.f32 %v593, %v598
          %v600 = vadd.f32 %v594, %v597
          %v601 = vrot.slane %v599, 6
          %v602 = vrot.slane %v600, 6
          %v603 = vsel %vm302, %v601, %v602
          %v604 = vsel %vm302, %v602, %v601
          %v605 = vadd.f32 %v599, %v604
          %v606 = vadd.f32 %v600, %v603
          %v607 = vmul.f32 %v605, -6.25
          %v608 = vmul.f32 %v606, -6.25
          %v609 = vld [vmem:[#allocation5] sm:$0xff]
          %v610 = vld [vmem:[#allocation5 + $0x8] sm:$0xff]
          %v611 = vmax.f32 %v609, %v607
          %v612 = vmax.f32 %v610, %v608
          %v613 = vmin.f32 %v609, %v607
          %v614 = vmin.f32 %v610, %v608
          %v615 = vsub.f32 %v613, %v611
          %v616 = vsub.f32 %v614, %v612
          %v617 = vmul.f32 %v615, 1.442695
          %v618 = vpow.pop %v617
          %v619 = vmul.f32 %v616, 1.442695
          %v620 = vpow.pop %v619
          %vm621 = vcmp.ge.f32.partialorder %v609, %v607
          %vm622 = vcmp.ge.f32.partialorder %v610, %v608
          %v623 = vsel %vm621, 1.0, %v618
          %v624 = vsel %vm622, 1.0, %v620
          %vm625 = vcmp.ge.f32.partialorder %v607, %v609
          %vm626 = vcmp.ge.f32.partialorder %v608, %v610
          %v627 = vsel %vm625, 1.0, %v618
          %v628 = vsel %vm626, 1.0, %v620
          %v629 = vld [vmem:[#allocation4] sm:$0xff]
          %v630 = vld [vmem:[#allocation4 + $0x8] sm:$0xff]
          %v631 = vmul.f32 %v623, %v629
          %v632 = vmul.f32 %v624, %v630
          %v633 = vadd.f32 %v631, %v627
          %v634 = vadd.f32 %v632, %v628
          %635 = vst [vmem:[#allocation4] sm:$0xff] %v633
          %636 = vst [vmem:[#allocation4 + $0x8] sm:$0xff] %v634
          %v637 = vld [vmem:[#allocation3] sm:$0xff]
          %v638 = vld [vmem:[#allocation3 + $0x8] sm:$0xff]
          %v639 = vmul.f32 %v623, %v637
          %v640 = vmul.f32 %v624, %v638
          %v641 = vmul.f32 %v627, %v550
          %v642 = vmul.f32 %v628, %v552
          %v643 = vadd.f32 %v639, %v641
          %v644 = vadd.f32 %v640, %v642
          %645 = vst [vmem:[#allocation3] sm:$0xff] %v643
          %646 = vst [vmem:[#allocation3 + $0x8] sm:$0xff] %v644
          %647 = vst [vmem:[#allocation5] sm:$0xff] %v611
          %648 = vst [vmem:[#allocation5 + $0x8] sm:$0xff] %v612
          %649 = vrot.lane.b32.xlu0 %v247, 124
          %v650 = vpop.permute.xlu0 %649
          %651 = vrot.lane.b32.xlu0 %v248, 124
          %v652 = vpop.permute.xlu0 %651
          %v653 = vsub.f32 %v189, %v650
          %v654 = vsub.f32 %v190, %v652
          %v655 = vand.u32 2147483647, %v653
          %v656 = vand.u32 2147483647, %v654
          %657 = vrot.lane.b32.xlu0 %v655, 127
          %v658 = vpop.permute.xlu0 %657
          %659 = vrot.lane.b32.xlu0 %v656, 127
          %v660 = vpop.permute.xlu0 %659
          %v661 = vadd.f32 %v655, %v658
          %v662 = vadd.f32 %v656, %v660
          %663 = vrot.lane.b32.xlu0 %v661, 126
          %v664 = vpop.permute.xlu0 %663
          %665 = vrot.lane.b32.xlu0 %v662, 126
          %v666 = vpop.permute.xlu0 %665
          %v667 = vadd.f32 %v661, %v664
          %v668 = vadd.f32 %v662, %v666
          %v669 = vrot.slane %v667, 1
          %v670 = vrot.slane %v668, 1
          %v671 = vsel %vm267, %v669, %v670
          %v672 = vsel %vm267, %v670, %v669
          %v673 = vadd.f32 %v667, %v671
          %v674 = vadd.f32 %v668, %v672
          %v675 = vrot.slane %v673, 2
          %v676 = vrot.slane %v674, 2
          %v677 = vsel %vm274, %v675, %v676
          %v678 = vsel %vm274, %v676, %v675
          %v679 = vadd.f32 %v673, %v677
          %v680 = vadd.f32 %v674, %v678
          %v681 = vsel %vm235, %v679, 0.0
          %v682 = vsel %vm236, %v680, 0.0
          %683 = vrot.lane.b32.xlu0 %v681, 1
          %v684 = vpop.permute.xlu0 %683
          %685 = vrot.lane.b32.xlu0 %v682, 1
          %v686 = vpop.permute.xlu0 %685
          %v687 = vadd.f32 %v681, %v684
          %v688 = vadd.f32 %v682, %v686
          %689 = vrot.lane.b32.xlu0 %v687, 2
          %v690 = vpop.permute.xlu0 %689
          %691 = vrot.lane.b32.xlu0 %v688, 2
          %v692 = vpop.permute.xlu0 %691
          %v693 = vadd.f32 %v687, %v690
          %v694 = vadd.f32 %v688, %v692
          %v695 = vrot.slane %v693, 7
          %v696 = vrot.slane %v694, 7
          %v697 = vsel %vm295, %v695, %v696
          %v698 = vsel %vm295, %v696, %v695
          %v699 = vadd.f32 %v693, %v698
          %v700 = vadd.f32 %v694, %v697
          %v701 = vrot.slane %v699, 6
          %v702 = vrot.slane %v700, 6
          %v703 = vsel %vm302, %v701, %v702
          %v704 = vsel %vm302, %v702, %v701
          %v705 = vadd.f32 %v699, %v704
          %v706 = vadd.f32 %v700, %v703
          %v707 = vmul.f32 %v705, -6.25
          %v708 = vmul.f32 %v706, -6.25
          %v709 = vld [vmem:[#allocation5] sm:$0xff]
          %v710 = vld [vmem:[#allocation5 + $0x8] sm:$0xff]
          %v711 = vmax.f32 %v709, %v707
          %v712 = vmax.f32 %v710, %v708
          %v713 = vmin.f32 %v709, %v707
          %v714 = vmin.f32 %v710, %v708
          %v715 = vsub.f32 %v713, %v711
          %v716 = vsub.f32 %v714, %v712
          %v717 = vmul.f32 %v715, 1.442695
          %v718 = vpow.pop %v717
          %v719 = vmul.f32 %v716, 1.442695
          %v720 = vpow.pop %v719
          %vm721 = vcmp.ge.f32.partialorder %v709, %v707
          %vm722 = vcmp.ge.f32.partialorder %v710, %v708
          %v723 = vsel %vm721, 1.0, %v718
          %v724 = vsel %vm722, 1.0, %v720
          %vm725 = vcmp.ge.f32.partialorder %v707, %v709
          %vm726 = vcmp.ge.f32.partialorder %v708, %v710
          %v727 = vsel %vm725, 1.0, %v718
          %v728 = vsel %vm726, 1.0, %v720
          %v729 = vld [vmem:[#allocation4] sm:$0xff]
          %v730 = vld [vmem:[#allocation4 + $0x8] sm:$0xff]
          %v731 = vmul.f32 %v723, %v729
          %v732 = vmul.f32 %v724, %v730
          %v733 = vadd.f32 %v731, %v727
          %v734 = vadd.f32 %v732, %v728
          %735 = vst [vmem:[#allocation4] sm:$0xff] %v733
          %736 = vst [vmem:[#allocation4 + $0x8] sm:$0xff] %v734
          %v737 = vld [vmem:[#allocation3] sm:$0xff]
          %v738 = vld [vmem:[#allocation3 + $0x8] sm:$0xff]
          %v739 = vmul.f32 %v723, %v737
          %v740 = vmul.f32 %v724, %v738
          %v741 = vmul.f32 %v727, %v650
          %v742 = vmul.f32 %v728, %v652
          %v743 = vadd.f32 %v739, %v741
          %v744 = vadd.f32 %v740, %v742
          %745 = vst [vmem:[#allocation3] sm:$0xff] %v743
          %746 = vst [vmem:[#allocation3 + $0x8] sm:$0xff] %v744
          %747 = vst [vmem:[#allocation5] sm:$0xff] %v711
          %748 = vst [vmem:[#allocation5 + $0x8] sm:$0xff] %v712
          %749 = vrot.lane.b32.xlu0 %v247, 123
          %v750 = vpop.permute.xlu0 %749
          %751 = vrot.lane.b32.xlu0 %v248, 123
          %v752 = vpop.permute.xlu0 %751
          %v753 = vsub.f32 %v189, %v750
          %v754 = vsub.f32 %v190, %v752
          %v755 = vand.u32 2147483647, %v753
          %v756 = vand.u32 2147483647, %v754
          %757 = vrot.lane.b32.xlu0 %v755, 127
          %v758 = vpop.permute.xlu0 %757
          %759 = vrot.lane.b32.xlu0 %v756, 127
          %v760 = vpop.permute.xlu0 %759
          %v761 = vadd.f32 %v755, %v758
          %v762 = vadd.f32 %v756, %v760
          %763 = vrot.lane.b32.xlu0 %v761, 126
          %v764 = vpop.permute.xlu0 %763
          %765 = vrot.lane.b32.xlu0 %v762, 126
          %v766 = vpop.permute.xlu0 %765
          %v767 = vadd.f32 %v761, %v764
          %v768 = vadd.f32 %v762, %v766
          %v769 = vrot.slane %v767, 1
          %v770 = vrot.slane %v768, 1
          %v771 = vsel %vm267, %v769, %v770
          %v772 = vsel %vm267, %v770, %v769
          %v773 = vadd.f32 %v767, %v771
          %v774 = vadd.f32 %v768, %v772
          %v775 = vrot.slane %v773, 2
          %v776 = vrot.slane %v774, 2
          %v777 = vsel %vm274, %v775, %v776
          %v778 = vsel %vm274, %v776, %v775
          %v779 = vadd.f32 %v773, %v777
          %v780 = vadd.f32 %v774, %v778
          %v781 = vsel %vm235, %v779, 0.0
          %v782 = vsel %vm236, %v780, 0.0
          %783 = vrot.lane.b32.xlu0 %v781, 1
          %v784 = vpop.permute.xlu0 %783
          %785 = vrot.lane.b32.xlu0 %v782, 1
          %v786 = vpop.permute.xlu0 %785
          %v787 = vadd.f32 %v781, %v784
          %v788 = vadd.f32 %v782, %v786
          %789 = vrot.lane.b32.xlu0 %v787, 2
          %v790 = vpop.permute.xlu0 %789
          %791 = vrot.lane.b32.xlu0 %v788, 2
          %v792 = vpop.permute.xlu0 %791
          %v793 = vadd.f32 %v787, %v790
          %v794 = vadd.f32 %v788, %v792
          %v795 = vrot.slane %v793, 7
          %v796 = vrot.slane %v794, 7
          %v797 = vsel %vm295, %v795, %v796
          %v798 = vsel %vm295, %v796, %v795
          %v799 = vadd.f32 %v793, %v798
          %v800 = vadd.f32 %v794, %v797
          %v801 = vrot.slane %v799, 6
          %v802 = vrot.slane %v800, 6
          %v803 = vsel %vm302, %v801, %v802
          %v804 = vsel %vm302, %v802, %v801
          %v805 = vadd.f32 %v799, %v804
          %v806 = vadd.f32 %v800, %v803
          %v807 = vmul.f32 %v805, -6.25
          %v808 = vmul.f32 %v806, -6.25
          %v809 = vld [vmem:[#allocation5] sm:$0xff]
          %v810 = vld [vmem:[#allocation5 + $0x8] sm:$0xff]
          %v811 = vmax.f32 %v809, %v807
          %v812 = vmax.f32 %v810, %v808
          %v813 = vmin.f32 %v809, %v807
          %v814 = vmin.f32 %v810, %v808
          %v815 = vsub.f32 %v813, %v811
          %v816 = vsub.f32 %v814, %v812
          %v817 = vmul.f32 %v815, 1.442695
          %v818 = vpow.pop %v817
          %v819 = vmul.f32 %v816, 1.442695
          %v820 = vpow.pop %v819
          %vm821 = vcmp.ge.f32.partialorder %v809, %v807
          %vm822 = vcmp.ge.f32.partialorder %v810, %v808
          %v823 = vsel %vm821, 1.0, %v818
          %v824 = vsel %vm822, 1.0, %v820
          %vm825 = vcmp.ge.f32.partialorder %v807, %v809
          %vm826 = vcmp.ge.f32.partialorder %v808, %v810
          %v827 = vsel %vm825, 1.0, %v818
          %v828 = vsel %vm826, 1.0, %v820
          %v829 = vld [vmem:[#allocation4] sm:$0xff]
          %v830 = vld [vmem:[#allocation4 + $0x8] sm:$0xff]
          %v831 = vmul.f32 %v823, %v829
          %v832 = vmul.f32 %v824, %v830
          %v833 = vadd.f32 %v831, %v827
          %v834 = vadd.f32 %v832, %v828
          %835 = vst [vmem:[#allocation4] sm:$0xff] %v833
          %836 = vst [vmem:[#allocation4 + $0x8] sm:$0xff] %v834
          %v837 = vld [vmem:[#allocation3] sm:$0xff]
          %v838 = vld [vmem:[#allocation3 + $0x8] sm:$0xff]
          %v839 = vmul.f32 %v823, %v837
          %v840 = vmul.f32 %v824, %v838
          %v841 = vmul.f32 %v827, %v750
          %v842 = vmul.f32 %v828, %v752
          %v843 = vadd.f32 %v839, %v841
          %v844 = vadd.f32 %v840, %v842
          %845 = vst [vmem:[#allocation3] sm:$0xff] %v843
          %846 = vst [vmem:[#allocation3 + $0x8] sm:$0xff] %v844
          %847 = vst [vmem:[#allocation5] sm:$0xff] %v811
          %848 = vst [vmem:[#allocation5 + $0x8] sm:$0xff] %v812
          %849 = vrot.lane.b32.xlu0 %v247, 122
          %v850 = vpop.permute.xlu0 %849
          %851 = vrot.lane.b32.xlu0 %v248, 122
          %v852 = vpop.permute.xlu0 %851
          %v853 = vsub.f32 %v189, %v850
          %v854 = vsub.f32 %v190, %v852
          %v855 = vand.u32 2147483647, %v853
          %v856 = vand.u32 2147483647, %v854
          %857 = vrot.lane.b32.xlu0 %v855, 127
          %v858 = vpop.permute.xlu0 %857
          %859 = vrot.lane.b32.xlu0 %v856, 127
          %v860 = vpop.permute.xlu0 %859
          %v861 = vadd.f32 %v855, %v858
          %v862 = vadd.f32 %v856, %v860
          %863 = vrot.lane.b32.xlu0 %v861, 126
          %v864 = vpop.permute.xlu0 %863
          %865 = vrot.lane.b32.xlu0 %v862, 126
          %v866 = vpop.permute.xlu0 %865
          %v867 = vadd.f32 %v861, %v864
          %v868 = vadd.f32 %v862, %v866
          %v869 = vrot.slane %v867, 1
          %v870 = vrot.slane %v868, 1
          %v871 = vsel %vm267, %v869, %v870
          %v872 = vsel %vm267, %v870, %v869
          %v873 = vadd.f32 %v867, %v871
          %v874 = vadd.f32 %v868, %v872
          %v875 = vrot.slane %v873, 2
          %v876 = vrot.slane %v874, 2
          %v877 = vsel %vm274, %v875, %v876
          %v878 = vsel %vm274, %v876, %v875
          %v879 = vadd.f32 %v873, %v877
          %v880 = vadd.f32 %v874, %v878
          %v881 = vsel %vm235, %v879, 0.0
          %v882 = vsel %vm236, %v880, 0.0
          %883 = vrot.lane.b32.xlu0 %v881, 1
          %v884 = vpop.permute.xlu0 %883
          %885 = vrot.lane.b32.xlu0 %v882, 1
          %v886 = vpop.permute.xlu0 %885
          %v887 = vadd.f32 %v881, %v884
          %v888 = vadd.f32 %v882, %v886
          %889 = vrot.lane.b32.xlu0 %v887, 2
          %v890 = vpop.permute.xlu0 %889
          %891 = vrot.lane.b32.xlu0 %v888, 2
          %v892 = vpop.permute.xlu0 %891
          %v893 = vadd.f32 %v887, %v890
          %v894 = vadd.f32 %v888, %v892
          %v895 = vrot.slane %v893, 7
          %v896 = vrot.slane %v894, 7
          %v897 = vsel %vm295, %v895, %v896
          %v898 = vsel %vm295, %v896, %v895
          %v899 = vadd.f32 %v893, %v898
          %v900 = vadd.f32 %v894, %v897
          %v901 = vrot.slane %v899, 6
          %v902 = vrot.slane %v900, 6
          %v903 = vsel %vm302, %v901, %v902
          %v904 = vsel %vm302, %v902, %v901
          %v905 = vadd.f32 %v899, %v904
          %v906 = vadd.f32 %v900, %v903
          %v907 = vmul.f32 %v905, -6.25
          %v908 = vmul.f32 %v906, -6.25
          %v909 = vld [vmem:[#allocation5] sm:$0xff]
          %v910 = vld [vmem:[#allocation5 + $0x8] sm:$0xff]
          %v911 = vmax.f32 %v909, %v907
          %v912 = vmax.f32 %v910, %v908
          %v913 = vmin.f32 %v909, %v907
          %v914 = vmin.f32 %v910, %v908
          %v915 = vsub.f32 %v913, %v911
          %v916 = vsub.f32 %v914, %v912
          %v917 = vmul.f32 %v915, 1.442695
          %v918 = vpow.pop %v917
          %v919 = vmul.f32 %v916, 1.442695
          %v920 = vpow.pop %v919
          %vm921 = vcmp.ge.f32.partialorder %v909, %v907
          %vm922 = vcmp.ge.f32.partialorder %v910, %v908
          %v923 = vsel %vm921, 1.0, %v918
          %v924 = vsel %vm922, 1.0, %v920
          %vm925 = vcmp.ge.f32.partialorder %v907, %v909
          %vm926 = vcmp.ge.f32.partialorder %v908, %v910
          %v927 = vsel %vm925, 1.0, %v918
          %v928 = vsel %vm926, 1.0, %v920
          %v929 = vld [vmem:[#allocation4] sm:$0xff]
          %v930 = vld [vmem:[#allocation4 + $0x8] sm:$0xff]
          %v931 = vmul.f32 %v923, %v929
          %v932 = vmul.f32 %v924, %v930
          %v933 = vadd.f32 %v931, %v927
          %v934 = vadd.f32 %v932, %v928
          %935 = vst [vmem:[#allocation4] sm:$0xff] %v933
          %936 = vst [vmem:[#allocation4 + $0x8] sm:$0xff] %v934
          %v937 = vld [vmem:[#allocation3] sm:$0xff]
          %v938 = vld [vmem:[#allocation3 + $0x8] sm:$0xff]
          %v939 = vmul.f32 %v923, %v937
          %v940 = vmul.f32 %v924, %v938
          %v941 = vmul.f32 %v927, %v850
          %v942 = vmul.f32 %v928, %v852
          %v943 = vadd.f32 %v939, %v941
          %v944 = vadd.f32 %v940, %v942
          %945 = vst [vmem:[#allocation3] sm:$0xff] %v943
          %946 = vst [vmem:[#allocation3 + $0x8] sm:$0xff] %v944
          %947 = vst [vmem:[#allocation5] sm:$0xff] %v911
          %948 = vst [vmem:[#allocation5 + $0x8] sm:$0xff] %v912
        $region51: #{tpu_custom_call.1} parent=23 // loop_footer
          %s245 = sadd.s32 1, %s241
        $region52: #{tpu_custom_call.1} parent=23 // loop_footer_branch
          %240 = sbr.rel target = $region48
        $region53: #{tpu_custom_call.1} parent=23 // loop_exit
          _
        %v949 = vld [vmem:[#allocation4] sm:$0xff]
        %v950 = vld [vmem:[#allocation4 + $0x8] sm:$0xff]
        %v951 = vrcp.pop %v949
        %v952 = vrcp.pop %v950
        %v953 = vmul.f32 %v949, %v951
        %v954 = vmul.f32 %v950, %v952
        %v955 = vsub.f32 2.0, %v953
        %v956 = vsub.f32 2.0, %v954
        %v957 = vmul.f32 %v951, %v955
        %v958 = vmul.f32 %v952, %v956
        %v959 = vld [vmem:[#allocation3] sm:$0xff]
        %v960 = vld [vmem:[#allocation3 + $0x8] sm:$0xff]
        %v961 = vmul.f32 %v959, %v957
        %v962 = vmul.f32 %v960, %v958
        %963 = vst [vmem:[%s135] sm:$0xff] %v961
        %964 = vst [vmem:[%s135 + $0x8] sm:$0xff] %v962
        %s965 = sand.u32 %s66, 1
        %s966 = scalar_lea.sflag [#allocation8], %s965
        %s967 = sand.u32 %s66, 1
        %s968 = smul.addr %s967, 16
        %s969 = scalar_lea.vmem [#allocation7], %s968
        // Predicated region
        $region54: #{tpu_custom_call.1} parent=23 // pred_check
          %p970 = pneg %p76
        $region55: #{tpu_custom_call.1} parent=23 // pred_check_branch
          %972 = sbr.rel (%p970) target = $region57
        $region56: #{tpu_custom_call.1} parent=23 // pred_region
          %s973 = smul.u32 2, %s21
          %975 = vsyncadd %s966, 0
          %s976 = smul.addr %s20, 2
          %s977 = sadd.s32 %s973, %s976
          %s978 = smul.addr %s977, 8
          %s979 = scalar_lea.hbm %s2, %s978
          %s980 = sshll.u32 %s969, 4
          %s981 = int_to_ptr.vmem [resolvable:$true] %s980
          %s982 = sshll.u32 %s979, 4
          %s983 = int_to_ptr.hbm [resolvable:$true] %s982
          %988 = dma.vmem_to_hbm [thread:$0]  %s981, 256, %s983, %s966, 128, 128, 8
        $region57: #{tpu_custom_call.1} parent=23 // pred_fallthru
          _
      $region24: #{tpu_custom_call.1} parent=5 // pred_fallthru
        _
      %p989 = scmp.le.s32.totalorder 2, %s11
      // Predicated region
      $region58: #{tpu_custom_call.1} parent=5 // pred_check
        %p990 = pneg %p989
      $region59: #{tpu_custom_call.1} parent=5 // pred_check_branch
        %992 = sbr.rel (%p990) target = $region61
      $region60: #{tpu_custom_call.1} parent=5 // pred_region
        %s993 = ssub.s32 %s11, 2
        // Predicated region
        $region62: #{tpu_custom_call.1} parent=60 // pred_check
          %p994 = pneg %p82
        $region63: #{tpu_custom_call.1} parent=60 // pred_check_branch
          %996 = sbr.rel (%p994) target = $region65
        $region64: #{tpu_custom_call.1} parent=60 // pred_region
          %s997 = sand.u32 %s67, 1
          %s998 = scalar_lea.sflag [#allocation8], %s997
          %s999 = sand.u32 %s67, 1
          %s1000 = smul.addr %s999, 16
          %s1001 = scalar_lea.vmem [#allocation7], %s1000
          %1003 = dma.done %s998, 256
        $region65: #{tpu_custom_call.1} parent=60 // pred_fallthru
          _
      $region61: #{tpu_custom_call.1} parent=5 // pred_fallthru
        _
    $region6: #{tpu_custom_call.1} parent=1 // loop_footer
      %s15 = sadd.s32 1, %s11
    $region7: #{tpu_custom_call.1} parent=1 // loop_footer_branch
      %10 = sbr.rel target = $region3
    $region8: #{tpu_custom_call.1} parent=1 // loop_exit
      _
    %1004 = vsyncpa [#allocation8], 1
    %s1005 = scalar_lea.sflag [#allocation8], 1
    %1006 = vsyncpa %s1005, 1
  %1007 = vsyncmov [#allocation6]
  %s1008 = vpop.sfrf %1007
  %p1009 = scmp.eq.s32.totalorder %s1008, 0
  %p1010 = pneg %p1009
  %1012 = shalt.err (%p1010)

</llo_original>
